<compile_context>
chip_gen: v6e
topology: v6e:2x2x1
jax: 0.10.0
libtpu: 0.0.40
codegen_flags: <defaults>
</compile_context>

<pallas_src>
import functools

import jax
import jax.numpy as jnp
from jax.experimental import pallas as pl
from jax.experimental.pallas import tpu as pltpu

BN_EPS = 1e-5
_VMEM_LIMIT = 48 * 1024 * 1024   # explicit scoped-VMEM budget, within v7x's 64 MiB physical


def _pick_row_tile(n_rows, cap):
    """Largest divisor of n_rows that is a multiple of 8 and <= cap (else full)."""
    cap = min(cap, n_rows)
    for t in range(cap - cap % 8, 7, -8):
        if n_rows % t == 0:
            return t
    return n_rows


def _halo_pad(W):
    """Zero-halo rows above/below one image, rounded to a sublane multiple (>= W+1)."""
    return ((W + 1 + 7) // 8) * 8


def _bn_affine(partial_stats, count, gamma, beta):
    """Fold per-tile (sum, sumsq) partials into per-channel BN scale/shift (tiny op)."""
    total = jnp.sum(partial_stats.astype(jnp.float32), axis=0)        # (2, C)
    mean = total[0] / count
    var = jnp.maximum(total[1] / count - mean * mean, 0.0)            # single-pass variance
    scale = gamma[0].astype(jnp.float32) * jax.lax.rsqrt(var + BN_EPS)
    shift = beta[0].astype(jnp.float32) - mean * scale
    return scale[None, :], shift[None, :]                             # (1, C) each


def _sum_sumsq(t):
    return jnp.concatenate(
        [jnp.sum(t, axis=0, keepdims=True),
         jnp.sum(t * t, axis=0, keepdims=True)], axis=0)              # (2, C)


# ----------------------------- pass 1: primary 1x1 conv -----------------------------
def _primary_conv_kernel(x_ref, w1_ref, x1_ref, s1_ref):
    x1 = jnp.dot(x_ref[...].astype(jnp.bfloat16), w1_ref[...],
                 preferred_element_type=jnp.float32)
    x1_ref[...] = x1
    s1_ref[0] = _sum_sumsq(x1)


# ------------------------- pass 2: BN1+ReLU + depthwise 3x3 -------------------------
def _cheap_op_kernel(H, W, x1r_ref, wdw_ref, sc1_ref, sh1_ref,
                     x1_ref, x2r_ref, s2_ref, pad_ref):
    HW = H * W
    PAD = _halo_pad(W)
    Ci = x1r_ref.shape[-1]

    # BatchNorm1 (precomputed per-channel affine) + ReLU, all in f32.
    x1 = jnp.maximum(x1r_ref[0] * sc1_ref[...] + sh1_ref[...], 0.0)
    x1_ref[0] = x1.astype(x1_ref.dtype)          # bf16 operand for the final matmul

    # Stage x1 into a zero-padded scratch: rows [PAD, PAD+HW) hold the image, the halo
    # strips stay zero (handles h-edge zero padding).  Re-zeroed every step because the
    # scratch persists across (possibly core-split) grid iterations.
    zeros = jnp.zeros((PAD, Ci), jnp.float32)
    pad_ref[0:PAD, :] = zeros
    pad_ref[PAD + HW:PAD + HW + PAD, :] = zeros
    pad_ref[PAD:PAD + HW, :] = x1

    # Left/right column masks (h edges are handled by the zero halo; the only wrap the
    # halo cannot catch is a dw=+-1 tap crossing a row boundary, which these masks kill).
    w_ids = jax.lax.broadcasted_iota(jnp.int32, (HW, 1), 0) % W
    mask_l = (w_ids >= 1).astype(jnp.float32)        # valid when dw == -1
    mask_r = (w_ids <= W - 2).astype(jnp.float32)    # valid when dw == +1

    acc = jnp.zeros((HW, Ci), jnp.float32)
    for kh in range(3):
        for kw in range(3):
            dh, dw = kh - 1, kw - 1
            off = PAD + dh * W + dw                           # static, >= 0
            tap = pad_ref[off:off + HW, :]                    # slice, not pltpu.roll
            if dw == -1:
                tap = tap * mask_l
            elif dw == 1:
                tap = tap * mask_r
            kvec = wdw_ref[kh * 3 + kw:kh * 3 + kw + 1, :]    # (1, Ci)
            acc = acc + tap * kvec

    x2r_ref[0] = acc
    s2_ref[0] = _sum_sumsq(acc)


# -------------------------- pass 3: BN2+ReLU + final 1x1 conv ------------------------
def _expand_conv_kernel(x1_ref, x2r_ref, sc2_ref, sh2_ref, w2a_ref, w2b_ref,
                        y_ref, s3_ref):
    x2 = jnp.maximum(x2r_ref[...] * sc2_ref[...] + sh2_ref[...], 0.0)
    # concat([x1, x2]) @ W2  ==  x1 @ W2[:Ci] + x2 @ W2[Ci:]   (avoids a lane concat)
    y = (jnp.dot(x1_ref[...], w2a_ref[...], preferred_element_type=jnp.float32)
         + jnp.dot(x2.astype(jnp.bfloat16), w2b_ref[...],
                   preferred_element_type=jnp.float32))
    y_ref[...] = y
    s3_ref[0] = _sum_sumsq(y)


# -------------------------------- pass 4: final BN3 ---------------------------------
def _bn_finalize_kernel(y_ref, sc3_ref, sh3_ref, out_ref):
    out_ref[...] = y_ref[...] * sc3_ref[...] + sh3_ref[...]


def ghost_mlp_forward(x, params, H, W, *, row_tile=256):
    """x: (B, N, C_in) with N == H*W (PyTorch GhostMLP.forward layout)."""
    B, N, Cin = x.shape
    assert N == H * W
    hidden, Cout = params["w2"].shape
    assert hidden % 2 == 0, "GhostModule with ratio=2 requires even hidden dim"
    Cinit = hidden // 2
    HW = H * W
    n_rows = B * HW
    f32, bf16 = jnp.float32, jnp.bfloat16

    x2d = x.reshape(n_rows, Cin).astype(f32)
    w1 = params["w1"].astype(bf16)                 # (Cin, Cinit)
    wdw = params["wdw"].astype(f32)                # (9, Cinit), row = kh*3+kw
    w2a = params["w2"][:Cinit].astype(bf16)        # (Cinit, Cout)   x1 half
    w2b = params["w2"][Cinit:].astype(bf16)        # (Cinit, Cout)   x2 half

    tile_r = _pick_row_tile(n_rows, row_tile)
    n_tiles = n_rows // tile_r
    PAD = _halo_pad(W)

    def cparams():
        return pltpu.CompilerParams(dimension_semantics=("parallel",),
                                    vmem_limit_bytes=_VMEM_LIMIT)

    # ---- pass 1: x1_raw = x @ W1 (bf16 MXU), partial BN1 stats ----------------------
    x1_raw, stats1 = pl.pallas_call(
        _primary_conv_kernel,
        grid=(n_tiles,),
        in_specs=[
            pl.BlockSpec((tile_r, Cin), lambda i: (i, 0)),
            pl.BlockSpec((Cin, Cinit), lambda i: (0, 0)),
        ],
        out_specs=(
            pl.BlockSpec((tile_r, Cinit), lambda i: (i, 0)),
            pl.BlockSpec((1, 2, Cinit), lambda i: (i, 0, 0)),
        ),
        out_shape=(
            jax.ShapeDtypeStruct((n_rows, Cinit), f32),
            jax.ShapeDtypeStruct((n_tiles, 2, Cinit), f32),
        ),
        compiler_params=cparams(),
        cost_estimate=pl.CostEstimate(
            flops=2 * n_rows * Cin * Cinit + 4 * n_rows * Cinit,
            transcendentals=0,
            bytes_accessed=4 * n_rows * (Cin + Cinit) + 2 * Cin * Cinit),
    )(x2d, w1)
    scale1, shift1 = _bn_affine(stats1, n_rows, params["g1"], params["b1"])

    # ---- pass 2: BN1+ReLU, depthwise 3x3 (per image), partial BN2 stats -------------
    # TODO(synk): for very large H*W, additionally tile H inside each image with a
    # one-row halo instead of one whole image per grid step.
    x1_act, x2_raw, stats2 = pl.pallas_call(
        functools.partial(_cheap_op_kernel, H, W),
        grid=(B,),
        in_specs=[
            pl.BlockSpec((1, HW, Cinit), lambda b: (b, 0, 0)),
            pl.BlockSpec((9, Cinit), lambda b: (0, 0)),
            pl.BlockSpec((1, Cinit), lambda b: (0, 0)),
            pl.BlockSpec((1, Cinit), lambda b: (0, 0)),
        ],
        out_specs=(
            pl.BlockSpec((1, HW, Cinit), lambda b: (b, 0, 0)),
            pl.BlockSpec((1, HW, Cinit), lambda b: (b, 0, 0)),
            pl.BlockSpec((1, 2, Cinit), lambda b: (b, 0, 0)),
        ),
        out_shape=(
            jax.ShapeDtypeStruct((B, HW, Cinit), bf16),    # x1 after BN1+ReLU
            jax.ShapeDtypeStruct((B, HW, Cinit), f32),     # x2 before BN2
            jax.ShapeDtypeStruct((B, 2, Cinit), f32),
        ),
        scratch_shapes=[pltpu.VMEM((HW + 2 * PAD, Cinit), f32)],
        compiler_params=cparams(),
        cost_estimate=pl.CostEstimate(
            flops=n_rows * Cinit * (2 * 9 + 8),
            transcendentals=0,
            bytes_accessed=4 * n_rows * Cinit * 2 + 2 * n_rows * Cinit),
    )(x1_raw.reshape(B, HW, Cinit), wdw, scale1, shift1)
    scale2, shift2 = _bn_affine(stats2, n_rows, params["g2"], params["b2"])

    # ---- pass 3: BN2+ReLU, y_raw = x1 @ W2a + x2 @ W2b, partial BN3 stats -----------
    y_raw, stats3 = pl.pallas_call(
        _expand_conv_kernel,
        grid=(n_tiles,),
        in_specs=[
            pl.BlockSpec((tile_r, Cinit), lambda i: (i, 0)),
            pl.BlockSpec((tile_r, Cinit), lambda i: (i, 0)),
            pl.BlockSpec((1, Cinit), lambda i: (0, 0)),
            pl.BlockSpec((1, Cinit), lambda i: (0, 0)),
            pl.BlockSpec((Cinit, Cout), lambda i: (0, 0)),
            pl.BlockSpec((Cinit, Cout), lambda i: (0, 0)),
        ],
        out_specs=(
            pl.BlockSpec((tile_r, Cout), lambda i: (i, 0)),
            pl.BlockSpec((1, 2, Cout), lambda i: (i, 0, 0)),
        ),
        out_shape=(
            jax.ShapeDtypeStruct((n_rows, Cout), f32),
            jax.ShapeDtypeStruct((n_tiles, 2, Cout), f32),
        ),
        compiler_params=cparams(),
        cost_estimate=pl.CostEstimate(
            flops=2 * n_rows * hidden * Cout + 8 * n_rows * Cout,
            transcendentals=0,
            bytes_accessed=6 * n_rows * Cinit + 4 * n_rows * Cout + 2 * hidden * Cout),
    )(x1_act.reshape(n_rows, Cinit), x2_raw.reshape(n_rows, Cinit),
      scale2, shift2, w2a, w2b)
    scale3, shift3 = _bn_affine(stats3, n_rows, params["g3"], params["b3"])

    # ---- pass 4: final BN3 normalize -------------------------------------------------
    out = pl.pallas_call(
        _bn_finalize_kernel,
        grid=(n_tiles,),
        in_specs=[
            pl.BlockSpec((tile_r, Cout), lambda i: (i, 0)),
            pl.BlockSpec((1, Cout), lambda i: (0, 0)),
            pl.BlockSpec((1, Cout), lambda i: (0, 0)),
        ],
        out_specs=pl.BlockSpec((tile_r, Cout), lambda i: (i, 0)),
        out_shape=jax.ShapeDtypeStruct((n_rows, Cout), f32),
        compiler_params=cparams(),
        cost_estimate=pl.CostEstimate(
            flops=2 * n_rows * Cout, transcendentals=0,
            bytes_accessed=8 * n_rows * Cout),
    )(y_raw, scale3, shift3)
    return out.reshape(B, N, Cout)


# --------------------------- pure-JAX reference (validation) -------------------------
def ghost_mlp_reference(x, params, H, W, matmul_dtype=jnp.float32):
    """NCHW lax-conv reference. matmul_dtype=bf16 matches the kernel's MXU precision."""
    B, N, Cin = x.shape
    hidden, Cout = params["w2"].shape
    Cinit = hidden // 2
    xi = jnp.transpose(x, (0, 2, 1)).reshape(B, Cin, H, W)

    def bn(t, gamma, beta):
        mu = jnp.mean(t, axis=(0, 2, 3), keepdims=True)
        var = jnp.mean(jnp.square(t - mu), axis=(0, 2, 3), keepdims=True)
        y = (t - mu) / jnp.sqrt(var + BN_EPS)
        return y * gamma.reshape(1, -1, 1, 1) + beta.reshape(1, -1, 1, 1)

    dn = ("NCHW", "OIHW", "NCHW")
    w1_oihw = params["w1"].T.reshape(Cinit, Cin, 1, 1).astype(matmul_dtype)
    x1 = jax.lax.conv_general_dilated(xi.astype(matmul_dtype), w1_oihw, (1, 1), "VALID",
                                      dimension_numbers=dn,
                                      preferred_element_type=jnp.float32)
    x1 = jnp.maximum(bn(x1, params["g1"][0], params["b1"][0]), 0.0)

    wdw_oihw = params["wdw"].reshape(3, 3, Cinit).transpose(2, 0, 1)[:, None]
    x2 = jax.lax.conv_general_dilated(x1, wdw_oihw, (1, 1), ((1, 1), (1, 1)),
                                      dimension_numbers=dn, feature_group_count=Cinit)
    x2 = jnp.maximum(bn(x2, params["g2"][0], params["b2"][0]), 0.0)

    ghost = jnp.concatenate([x1, x2], axis=1)[:, :hidden].astype(matmul_dtype)
    w2_oihw = params["w2"].T.reshape(Cout, hidden, 1, 1).astype(matmul_dtype)
    y = jax.lax.conv_general_dilated(ghost, w2_oihw, (1, 1), "VALID",
                                     dimension_numbers=dn,
                                     preferred_element_type=jnp.float32)
    y = bn(y, params["g3"][0], params["b3"][0])
    return jnp.transpose(y.reshape(B, Cout, N), (0, 2, 1))


if __name__ == "__main__":
    B, H, W = 2, 8, 8
    Cin, hidden, Cout = 16, 32, 16          # in_features, hidden_features, out_features
    Cinit = hidden // 2
    N = H * W

    key = jax.random.PRNGKey(0)
    k_x, k_w1, k_wdw, k_w2 = jax.random.split(key, 4)
    x = jax.random.normal(k_x, (B, N, Cin), dtype=jnp.float32)

    # Deterministic parameter init (PyTorch BN defaults: gamma=1, beta=0, training mode).
    params = dict(
        w1=0.1 * jax.random.normal(k_w1, (Cin, Cinit), jnp.float32),
        wdw=0.1 * jax.random.normal(k_wdw, (9, Cinit), jnp.float32),
        w2=0.1 * jax.random.normal(k_w2, (hidden, Cout), jnp.float32),
        g1=jnp.ones((1, Cinit), jnp.float32), b1=jnp.zeros((1, Cinit), jnp.float32),
        g2=jnp.ones((1, Cinit), jnp.float32), b2=jnp.zeros((1, Cinit), jnp.float32),
        g3=jnp.ones((1, Cout), jnp.float32), b3=jnp.zeros((1, Cout), jnp.float32),
    )

    # Small row_tile so the multi-tile / partial-BN-stat paths are exercised (4 tiles).
    fwd = jax.jit(functools.partial(ghost_mlp_forward, H=H, W=W, row_tile=32))
    out = jax.block_until_ready(fwd(x, params))
    assert out.shape == (B, N, Cout)

    # Precision-matched reference (bf16 matmuls, f32 everything else): tight check.
    ref_bf16 = ghost_mlp_reference(x, params, H, W, matmul_dtype=jnp.bfloat16)
    err_bf16 = float(jnp.max(jnp.abs(out - ref_bf16)))
    assert err_bf16 < 5e-3, err_bf16

    # Full-f32 reference: loose sanity check (difference is pure bf16 matmul rounding).
    ref_f32 = ghost_mlp_reference(x, params, H, W, matmul_dtype=jnp.float32)
    err_f32 = float(jnp.max(jnp.abs(out - ref_f32)))
    assert err_f32 < 0.25, err_f32

    print("KERNEL_OK")
</pallas_src>

<mosaic_0001>
module attributes {stable_mosaic.version = 11 : i64} {
  func.func @_primary_conv_kernel(%arg0: i32, %arg1: memref<32x16xf32, #tpu.memory_space<vmem>>, %arg2: memref<16x16xbf16, #tpu.memory_space<vmem>>, %arg3: memref<32x16xf32, #tpu.memory_space<vmem>>, %arg4: memref<1x2x16xf32, #tpu.memory_space<vmem>>) attributes {dimension_semantics = [#tpu.dimension_semantics<parallel>], iteration_bounds = array<i64: 4>, scalar_prefetch = 0 : i64, scratch_operands = 0 : i64, tpu.core_type = #tpu.core_type<tc>, window_params = [{transform_indices = @transform_0, window_bounds = array<i64: 32, 16>}, {pipeline_mode = #tpu.pipeline_mode<synchronous>, transform_indices = @transform_1, window_bounds = array<i64: 16, 16>}, {transform_indices = @transform_2, window_bounds = array<i64: 32, 16>}, {transform_indices = @transform_3, window_bounds = array<i64: 1, 2, 16>}]} {
    %c0 = arith.constant 0 : index
    %c0_0 = arith.constant 0 : index
    %0 = vector.load %arg1[%c0, %c0_0] : memref<32x16xf32, #tpu.memory_space<vmem>>, vector<32x16xf32>
    %1 = arith.truncf %0 : vector<32x16xf32> to vector<32x16xbf16>
    %c0_1 = arith.constant 0 : index
    %c0_2 = arith.constant 0 : index
    %2 = vector.load %arg2[%c0_1, %c0_2] : memref<16x16xbf16, #tpu.memory_space<vmem>>, vector<16x16xbf16>
    %cst = arith.constant dense<0.000000e+00> : vector<32x16xf32>
    %3 = tpu.matmul %1, %2, %cst {dimension_numbers = #tpu.dot_dimension_numbers<[1], [0], [0], [1], [0, 0, 1, 1], [], []>} : vector<32x16xbf16>, vector<16x16xbf16>, vector<32x16xf32> -> vector<32x16xf32>
    %c0_3 = arith.constant 0 : index
    %c0_4 = arith.constant 0 : index
    %4 = vector.load %arg3[%c0_3, %c0_4] : memref<32x16xf32, #tpu.memory_space<vmem>>, vector<32x16xf32>
    tpu.vector_store %arg3[%c0_3, %c0_4], %3 {strides = array<i32>} : memref<32x16xf32, #tpu.memory_space<vmem>>, vector<32x16xf32>,
    %cst_5 = arith.constant dense<0.000000e+00> : vector<16xf32>
    %5 = vector.multi_reduction <add>, %3, %cst_5 [0] : vector<32x16xf32> to vector<16xf32>
    %6 = vector.shape_cast %5 : vector<16xf32> to vector<1x16xf32>
    %7 = arith.mulf %3, %3 : vector<32x16xf32>
    %cst_6 = arith.constant dense<0.000000e+00> : vector<16xf32>
    %8 = vector.multi_reduction <add>, %7, %cst_6 [0] : vector<32x16xf32> to vector<16xf32>
    %9 = vector.shape_cast %8 : vector<16xf32> to vector<1x16xf32>
    %10 = tpu.concatenate %6, %9 in 0 : vector<1x16xf32>, vector<1x16xf32> -> vector<2x16xf32>
    %c0_7 = arith.constant 0 : index
    %c0_8 = arith.constant 0 : index
    %c0_9 = arith.constant 0 : index
    %11 = vector.load %arg4[%c0_7, %c0_8, %c0_9] : memref<1x2x16xf32, #tpu.memory_space<vmem>>, vector<1x2x16xf32>
    %12 = vector.shape_cast %11 : vector<1x2x16xf32> to vector<2x16xf32>
    %13 = vector.shape_cast %10 : vector<2x16xf32> to vector<1x2x16xf32>
    tpu.vector_store %arg4[%c0_7, %c0_8, %c0_9], %13 {strides = array<i32>} : memref<1x2x16xf32, #tpu.memory_space<vmem>>, vector<1x2x16xf32>,
    return
  }
  func.func @transform_0(%arg0: i32) -> (i32, i32) {
    %c0_i32 = arith.constant 0 : i32
    %c0_i32_0 = arith.constant 0 : i32
    return %arg0, %c0_i32 : i32, i32
  }
  func.func @transform_1(%arg0: i32) -> (i32, i32) {
    %c0_i32 = arith.constant 0 : i32
    %c0_i32_0 = arith.constant 0 : i32
    %c0_i32_1 = arith.constant 0 : i32
    return %c0_i32, %c0_i32_0 : i32, i32
  }
  func.func @transform_2(%arg0: i32) -> (i32, i32) {
    %c0_i32 = arith.constant 0 : i32
    %c0_i32_0 = arith.constant 0 : i32
    return %arg0, %c0_i32 : i32, i32
  }
  func.func @transform_3(%arg0: i32) -> (i32, i32, i32) {
    %c0_i32 = arith.constant 0 : i32
    %c0_i32_0 = arith.constant 0 : i32
    %c0_i32_1 = arith.constant 0 : i32
    return %arg0, %c0_i32, %c0_i32_0 : i32, i32, i32
  }
}

module attributes {stable_mosaic.version = 11 : i64} {
  func.func @_expand_conv_kernel(%arg0: i32, %arg1: memref<32x16xbf16, #tpu.memory_space<vmem>>, %arg2: memref<32x16xf32, #tpu.memory_space<vmem>>, %arg3: memref<1x16xf32, #tpu.memory_space<vmem>>, %arg4: memref<1x16xf32, #tpu.memory_space<vmem>>, %arg5: memref<16x16xbf16, #tpu.memory_space<vmem>>, %arg6: memref<16x16xbf16, #tpu.memory_space<vmem>>, %arg7: memref<32x16xf32, #tpu.memory_space<vmem>>, %arg8: memref<1x2x16xf32, #tpu.memory_space<vmem>>) attributes {dimension_semantics = [#tpu.dimension_semantics<parallel>], iteration_bounds = array<i64: 4>, scalar_prefetch = 0 : i64, scratch_operands = 0 : i64, tpu.core_type = #tpu.core_type<tc>, window_params = [{transform_indices = @transform_0, window_bounds = array<i64: 32, 16>}, {transform_indices = @transform_1, window_bounds = array<i64: 32, 16>}, {pipeline_mode = #tpu.pipeline_mode<synchronous>, transform_indices = @transform_2, window_bounds = array<i64: 1, 16>}, {pipeline_mode = #tpu.pipeline_mode<synchronous>, transform_indices = @transform_3, window_bounds = array<i64: 1, 16>}, {pipeline_mode = #tpu.pipeline_mode<synchronous>, transform_indices = @transform_4, window_bounds = array<i64: 16, 16>}, {pipeline_mode = #tpu.pipeline_mode<synchronous>, transform_indices = @transform_5, window_bounds = array<i64: 16, 16>}, {transform_indices = @transform_6, window_bounds = array<i64: 32, 16>}, {transform_indices = @transform_7, window_bounds = array<i64: 1, 2, 16>}]} {
    %c0 = arith.constant 0 : index
    %c0_0 = arith.constant 0 : index
    %0 = vector.load %arg2[%c0, %c0_0] : memref<32x16xf32, #tpu.memory_space<vmem>>, vector<32x16xf32>
    %c0_1 = arith.constant 0 : index
    %c0_2 = arith.constant 0 : index
    %1 = vector.load %arg3[%c0_1, %c0_2] : memref<1x16xf32, #tpu.memory_space<vmem>>, vector<1x16xf32>
    %2 = vector.broadcast %1 : vector<1x16xf32> to vector<32x16xf32>
    %3 = arith.mulf %0, %2 : vector<32x16xf32>
    %c0_3 = arith.constant 0 : index
    %c0_4 = arith.constant 0 : index
    %4 = vector.load %arg4[%c0_3, %c0_4] : memref<1x16xf32, #tpu.memory_space<vmem>>, vector<1x16xf32>
    %5 = vector.broadcast %4 : vector<1x16xf32> to vector<32x16xf32>
    %6 = arith.addf %3, %5 : vector<32x16xf32>
    %cst = arith.constant 0.000000e+00 : f32
    %7 = vector.broadcast %cst : f32 to vector<32x16xf32>
    %8 = arith.maximumf %6, %7 : vector<32x16xf32>
    %c0_5 = arith.constant 0 : index
    %c0_6 = arith.constant 0 : index
    %9 = vector.load %arg1[%c0_5, %c0_6] : memref<32x16xbf16, #tpu.memory_space<vmem>>, vector<32x16xbf16>
    %c0_7 = arith.constant 0 : index
    %c0_8 = arith.constant 0 : index
    %10 = vector.load %arg5[%c0_7, %c0_8] : memref<16x16xbf16, #tpu.memory_space<vmem>>, vector<16x16xbf16>
    %cst_9 = arith.constant dense<0.000000e+00> : vector<32x16xf32>
    %11 = tpu.matmul %9, %10, %cst_9 {dimension_numbers = #tpu.dot_dimension_numbers<[1], [0], [0], [1], [0, 0, 1, 1], [], []>} : vector<32x16xbf16>, vector<16x16xbf16>, vector<32x16xf32> -> vector<32x16xf32>
    %12 = arith.truncf %8 : vector<32x16xf32> to vector<32x16xbf16>
    %c0_10 = arith.constant 0 : index
    %c0_11 = arith.constant 0 : index
    %13 = vector.load %arg6[%c0_10, %c0_11] : memref<16x16xbf16, #tpu.memory_space<vmem>>, vector<16x16xbf16>
    %cst_12 = arith.constant dense<0.000000e+00> : vector<32x16xf32>
    %14 = tpu.matmul %12, %13, %cst_12 {dimension_numbers = #tpu.dot_dimension_numbers<[1], [0], [0], [1], [0, 0, 1, 1], [], []>} : vector<32x16xbf16>, vector<16x16xbf16>, vector<32x16xf32> -> vector<32x16xf32>
    %15 = arith.addf %11, %14 : vector<32x16xf32>
    %c0_13 = arith.constant 0 : index
    %c0_14 = arith.constant 0 : index
    %16 = vector.load %arg7[%c0_13, %c0_14] : memref<32x16xf32, #tpu.memory_space<vmem>>, vector<32x16xf32>
    tpu.vector_store %arg7[%c0_13, %c0_14], %15 {strides = array<i32>} : memref<32x16xf32, #tpu.memory_space<vmem>>, vector<32x16xf32>,
    %cst_15 = arith.constant dense<0.000000e+00> : vector<16xf32>
    %17 = vector.multi_reduction <add>, %15, %cst_15 [0] : vector<32x16xf32> to vector<16xf32>
    %18 = vector.shape_cast %17 : vector<16xf32> to vector<1x16xf32>
    %19 = arith.mulf %15, %15 : vector<32x16xf32>
    %cst_16 = arith.constant dense<0.000000e+00> : vector<16xf32>
    %20 = vector.multi_reduction <add>, %19, %cst_16 [0] : vector<32x16xf32> to vector<16xf32>
    %21 = vector.shape_cast %20 : vector<16xf32> to vector<1x16xf32>
    %22 = tpu.concatenate %18, %21 in 0 : vector<1x16xf32>, vector<1x16xf32> -> vector<2x16xf32>
    %c0_17 = arith.constant 0 : index
    %c0_18 = arith.constant 0 : index
    %c0_19 = arith.constant 0 : index
    %23 = vector.load %arg8[%c0_17, %c0_18, %c0_19] : memref<1x2x16xf32, #tpu.memory_space<vmem>>, vector<1x2x16xf32>
    %24 = vector.shape_cast %23 : vector<1x2x16xf32> to vector<2x16xf32>
    %25 = vector.shape_cast %22 : vector<2x16xf32> to vector<1x2x16xf32>
    tpu.vector_store %arg8[%c0_17, %c0_18, %c0_19], %25 {strides = array<i32>} : memref<1x2x16xf32, #tpu.memory_space<vmem>>, vector<1x2x16xf32>,
    return
  }
  func.func @transform_0(%arg0: i32) -> (i32, i32) {
    %c0_i32 = arith.constant 0 : i32
    %c0_i32_0 = arith.constant 0 : i32
    return %arg0, %c0_i32 : i32, i32
  }
  func.func @transform_1(%arg0: i32) -> (i32, i32) {
    %c0_i32 = arith.constant 0 : i32
    %c0_i32_0 = arith.constant 0 : i32
    return %arg0, %c0_i32 : i32, i32
  }
  func.func @transform_2(%arg0: i32) -> (i32, i32) {
    %c0_i32 = arith.constant 0 : i32
    %c0_i32_0 = arith.constant 0 : i32
    %c0_i32_1 = arith.constant 0 : i32
    return %c0_i32, %c0_i32_0 : i32, i32
  }
  func.func @transform_3(%arg0: i32) -> (i32, i32) {
    %c0_i32 = arith.constant 0 : i32
    %c0_i32_0 = arith.constant 0 : i32
    %c0_i32_1 = arith.constant 0 : i32
    return %c0_i32, %c0_i32_0 : i32, i32
  }
  func.func @transform_4(%arg0: i32) -> (i32, i32) {
    %c0_i32 = arith.constant 0 : i32
    %c0_i32_0 = arith.constant 0 : i32
    %c0_i32_1 = arith.constant 0 : i32
    return %c0_i32, %c0_i32_0 : i32, i32
  }
  func.func @transform_5(%arg0: i32) -> (i32, i32) {
    %c0_i32 = arith.constant 0 : i32
    %c0_i32_0 = arith.constant 0 : i32
    %c0_i32_1 = arith.constant 0 : i32
    return %c0_i32, %c0_i32_0 : i32, i32
  }
  func.func @transform_6(%arg0: i32) -> (i32, i32) {
    %c0_i32 = arith.constant 0 : i32
    %c0_i32_0 = arith.constant 0 : i32
    return %arg0, %c0_i32 : i32, i32
  }
  func.func @transform_7(%arg0: i32) -> (i32, i32, i32) {
    %c0_i32 = arith.constant 0 : i32
    %c0_i32_0 = arith.constant 0 : i32
    %c0_i32_1 = arith.constant 0 : i32
    return %arg0, %c0_i32, %c0_i32_0 : i32, i32, i32
  }
}

module attributes {stable_mosaic.version = 11 : i64} {
  func.func @_bn_finalize_kernel(%arg0: i32, %arg1: memref<32x16xf32, #tpu.memory_space<vmem>>, %arg2: memref<1x16xf32, #tpu.memory_space<vmem>>, %arg3: memref<1x16xf32, #tpu.memory_space<vmem>>, %arg4: memref<32x16xf32, #tpu.memory_space<vmem>>) attributes {dimension_semantics = [#tpu.dimension_semantics<parallel>], iteration_bounds = array<i64: 4>, scalar_prefetch = 0 : i64, scratch_operands = 0 : i64, tpu.core_type = #tpu.core_type<tc>, window_params = [{transform_indices = @transform_0, window_bounds = array<i64: 32, 16>}, {pipeline_mode = #tpu.pipeline_mode<synchronous>, transform_indices = @transform_1, window_bounds = array<i64: 1, 16>}, {pipeline_mode = #tpu.pipeline_mode<synchronous>, transform_indices = @transform_2, window_bounds = array<i64: 1, 16>}, {transform_indices = @transform_3, window_bounds = array<i64: 32, 16>}]} {
    %c0 = arith.constant 0 : index
    %c0_0 = arith.constant 0 : index
    %0 = vector.load %arg1[%c0, %c0_0] : memref<32x16xf32, #tpu.memory_space<vmem>>, vector<32x16xf32>
    %c0_1 = arith.constant 0 : index
    %c0_2 = arith.constant 0 : index
    %1 = vector.load %arg2[%c0_1, %c0_2] : memref<1x16xf32, #tpu.memory_space<vmem>>, vector<1x16xf32>
    %2 = vector.broadcast %1 : vector<1x16xf32> to vector<32x16xf32>
    %3 = arith.mulf %0, %2 : vector<32x16xf32>
    %c0_3 = arith.constant 0 : index
    %c0_4 = arith.constant 0 : index
    %4 = vector.load %arg3[%c0_3, %c0_4] : memref<1x16xf32, #tpu.memory_space<vmem>>, vector<1x16xf32>
    %5 = vector.broadcast %4 : vector<1x16xf32> to vector<32x16xf32>
    %6 = arith.addf %3, %5 : vector<32x16xf32>
    %c0_5 = arith.constant 0 : index
    %c0_6 = arith.constant 0 : index
    %7 = vector.load %arg4[%c0_5, %c0_6] : memref<32x16xf32, #tpu.memory_space<vmem>>, vector<32x16xf32>
    tpu.vector_store %arg4[%c0_5, %c0_6], %6 {strides = array<i32>} : memref<32x16xf32, #tpu.memory_space<vmem>>, vector<32x16xf32>,
    return
  }
  func.func @transform_0(%arg0: i32) -> (i32, i32) {
    %c0_i32 = arith.constant 0 : i32
    %c0_i32_0 = arith.constant 0 : i32
    return %arg0, %c0_i32 : i32, i32
  }
  func.func @transform_1(%arg0: i32) -> (i32, i32) {
    %c0_i32 = arith.constant 0 : i32
    %c0_i32_0 = arith.constant 0 : i32
    %c0_i32_1 = arith.constant 0 : i32
    return %c0_i32, %c0_i32_0 : i32, i32
  }
  func.func @transform_2(%arg0: i32) -> (i32, i32) {
    %c0_i32 = arith.constant 0 : i32
    %c0_i32_0 = arith.constant 0 : i32
    %c0_i32_1 = arith.constant 0 : i32
    return %c0_i32, %c0_i32_0 : i32, i32
  }
  func.func @transform_3(%arg0: i32) -> (i32, i32) {
    %c0_i32 = arith.constant 0 : i32
    %c0_i32_0 = arith.constant 0 : i32
    return %arg0, %c0_i32 : i32, i32
  }
}

module attributes {stable_mosaic.version = 11 : i64} {
  func.func @_cheap_op_kernel(%arg0: i32, %arg1: memref<1x64x16xf32, #tpu.memory_space<vmem>>, %arg2: memref<9x16xf32, #tpu.memory_space<vmem>>, %arg3: memref<1x16xf32, #tpu.memory_space<vmem>>, %arg4: memref<1x16xf32, #tpu.memory_space<vmem>>, %arg5: memref<1x64x16xbf16, #tpu.memory_space<vmem>>, %arg6: memref<1x64x16xf32, #tpu.memory_space<vmem>>, %arg7: memref<1x2x16xf32, #tpu.memory_space<vmem>>, %arg8: memref<96x16xf32, #tpu.memory_space<vmem>>) attributes {dimension_semantics = [#tpu.dimension_semantics<parallel>], iteration_bounds = array<i64: 2>, scalar_prefetch = 0 : i64, scratch_operands = 1 : i64, tpu.core_type = #tpu.core_type<tc>, window_params = [{transform_indices = @transform_0, window_bounds = array<i64: 1, 64, 16>}, {pipeline_mode = #tpu.pipeline_mode<synchronous>, transform_indices = @transform_1, window_bounds = array<i64: 9, 16>}, {pipeline_mode = #tpu.pipeline_mode<synchronous>, transform_indices = @transform_2, window_bounds = array<i64: 1, 16>}, {pipeline_mode = #tpu.pipeline_mode<synchronous>, transform_indices = @transform_3, window_bounds = array<i64: 1, 16>}, {transform_indices = @transform_4, window_bounds = array<i64: 1, 64, 16>}, {transform_indices = @transform_5, window_bounds = array<i64: 1, 64, 16>}, {transform_indices = @transform_6, window_bounds = array<i64: 1, 2, 16>}]} {
    %c0 = arith.constant 0 : index
    %c0_0 = arith.constant 0 : index
    %c0_1 = arith.constant 0 : index
    %0 = vector.load %arg1[%c0, %c0_0, %c0_1] : memref<1x64x16xf32, #tpu.memory_space<vmem>>, vector<1x64x16xf32>
    %1 = vector.shape_cast %0 : vector<1x64x16xf32> to vector<64x16xf32>
    %c0_2 = arith.constant 0 : index
    %c0_3 = arith.constant 0 : index
    %2 = vector.load %arg3[%c0_2, %c0_3] : memref<1x16xf32, #tpu.memory_space<vmem>>, vector<1x16xf32>
    %3 = vector.broadcast %2 : vector<1x16xf32> to vector<64x16xf32>
    %4 = arith.mulf %1, %3 : vector<64x16xf32>
    %c0_4 = arith.constant 0 : index
    %c0_5 = arith.constant 0 : index
    %5 = vector.load %arg4[%c0_4, %c0_5] : memref<1x16xf32, #tpu.memory_space<vmem>>, vector<1x16xf32>
    %6 = vector.broadcast %5 : vector<1x16xf32> to vector<64x16xf32>
    %7 = arith.addf %4, %6 : vector<64x16xf32>
    %cst = arith.constant 0.000000e+00 : f32
    %8 = vector.broadcast %cst : f32 to vector<64x16xf32>
    %9 = arith.maximumf %7, %8 : vector<64x16xf32>
    %10 = arith.truncf %9 : vector<64x16xf32> to vector<64x16xbf16>
    %c0_6 = arith.constant 0 : index
    %c0_7 = arith.constant 0 : index
    %c0_8 = arith.constant 0 : index
    %11 = vector.load %arg5[%c0_6, %c0_7, %c0_8] : memref<1x64x16xbf16, #tpu.memory_space<vmem>>, vector<1x64x16xbf16>
    %12 = vector.shape_cast %11 : vector<1x64x16xbf16> to vector<64x16xbf16>
    %13 = vector.shape_cast %10 : vector<64x16xbf16> to vector<1x64x16xbf16>
    tpu.vector_store %arg5[%c0_6, %c0_7, %c0_8], %13 {strides = array<i32>} : memref<1x64x16xbf16, #tpu.memory_space<vmem>>, vector<1x64x16xbf16>,
    %cst_9 = arith.constant 0.000000e+00 : f32
    %14 = vector.broadcast %cst_9 : f32 to vector<16x16xf32>
    %c0_10 = arith.constant 0 : index
    %c0_11 = arith.constant 0 : index
    %15 = vector.load %arg8[%c0_10, %c0_11] : memref<96x16xf32, #tpu.memory_space<vmem>>, vector<16x16xf32>
    tpu.vector_store %arg8[%c0_10, %c0_11], %14 {strides = array<i32>} : memref<96x16xf32, #tpu.memory_space<vmem>>, vector<16x16xf32>,
    %c80 = arith.constant 80 : index
    %c0_12 = arith.constant 0 : index
    %16 = vector.load %arg8[%c80, %c0_12] : memref<96x16xf32, #tpu.memory_space<vmem>>, vector<16x16xf32>
    tpu.vector_store %arg8[%c80, %c0_12], %14 {strides = array<i32>} : memref<96x16xf32, #tpu.memory_space<vmem>>, vector<16x16xf32>,
    %c16 = arith.constant 16 : index
    %c0_13 = arith.constant 0 : index
    %17 = vector.load %arg8[%c16, %c0_13] : memref<96x16xf32, #tpu.memory_space<vmem>>, vector<64x16xf32>
    tpu.vector_store %arg8[%c16, %c0_13], %9 {strides = array<i32>} : memref<96x16xf32, #tpu.memory_space<vmem>>, vector<64x16xf32>,
    %18 = tpu.iota {dimensions = array<i32: 0>} : vector<64x1xi32>
    %c8_i32 = arith.constant 8 : i32
    %c0_i32 = arith.constant 0 : i32
    %19 = arith.cmpi eq, %c8_i32, %c0_i32 : i32
    %c1_i32 = arith.constant 1 : i32
    %20 = arith.select %19, %c1_i32, %c8_i32 : i32
    %21 = vector.broadcast %20 : i32 to vector<64x1xi32>
    %22 = arith.remsi %18, %21 : vector<64x1xi32>
    %c0_i32_14 = arith.constant 0 : i32
    %23 = vector.broadcast %c0_i32_14 : i32 to vector<64x1xi32>
    %24 = arith.cmpi ne, %22, %23 : vector<64x1xi32>
    %c0_i32_15 = arith.constant 0 : i32
    %25 = vector.broadcast %c0_i32_15 : i32 to vector<64x1xi32>
    %26 = arith.cmpi slt, %22, %25 : vector<64x1xi32>
    %c0_i32_16 = arith.constant 0 : i32
    %27 = arith.cmpi slt, %20, %c0_i32_16 : i32
    %28 = vector.broadcast %27 : i1 to vector<64x1xi1>
    %29 = vector.broadcast %28 : vector<64x1xi1> to vector<64x1xi1>
    %30 = arith.xori %26, %29 : vector<64x1xi1>
    %31 = arith.andi %30, %24 : vector<64x1xi1>
    %32 = vector.broadcast %20 : i32 to vector<64x1xi32>
    %33 = arith.addi %22, %32 : vector<64x1xi32>
    %34 = arith.select %31, %33, %22 : vector<64x1xi1>, vector<64x1xi32>
    %c1_i32_17 = arith.constant 1 : i32
    %35 = vector.broadcast %c1_i32_17 : i32 to vector<64x1xi32>
    %36 = arith.cmpi sge, %34, %35 : vector<64x1xi32>
    %37 = arith.extui %36 : vector<64x1xi1> to vector<64x1xi32>
    %38 = arith.sitofp %37 : vector<64x1xi32> to vector<64x1xf32>
    %c6_i32 = arith.constant 6 : i32
    %39 = vector.broadcast %c6_i32 : i32 to vector<64x1xi32>
    %40 = arith.cmpi sle, %34, %39 : vector<64x1xi32>
    %41 = arith.extui %40 : vector<64x1xi1> to vector<64x1xi32>
    %42 = arith.sitofp %41 : vector<64x1xi32> to vector<64x1xf32>
    %cst_18 = arith.constant 0.000000e+00 : f32
    %43 = vector.broadcast %cst_18 : f32 to vector<64x16xf32>
    %c7 = arith.constant 7 : index
    %c0_19 = arith.constant 0 : index
    %44 = vector.load %arg8[%c7, %c0_19] : memref<96x16xf32, #tpu.memory_space<vmem>>, vector<64x16xf32>
    %45 = vector.broadcast %38 : vector<64x1xf32> to vector<64x16xf32>
    %46 = arith.mulf %44, %45 : vector<64x16xf32>
    %c0_20 = arith.constant 0 : index
    %c0_21 = arith.constant 0 : index
    %47 = vector.load %arg2[%c0_20, %c0_21] : memref<9x16xf32, #tpu.memory_space<vmem>>, vector<1x16xf32>
    %48 = vector.broadcast %47 : vector<1x16xf32> to vector<64x16xf32>
    %49 = arith.mulf %46, %48 : vector<64x16xf32>
    %50 = arith.addf %43, %49 : vector<64x16xf32>
    %c8 = arith.constant 8 : index
    %c0_22 = arith.constant 0 : index
    %51 = vector.load %arg8[%c8, %c0_22] : memref<96x16xf32, #tpu.memory_space<vmem>>, vector<64x16xf32>
    %c1 = arith.constant 1 : index
    %c0_23 = arith.constant 0 : index
    %52 = vector.load %arg2[%c1, %c0_23] : memref<9x16xf32, #tpu.memory_space<vmem>>, vector<1x16xf32>
    %53 = vector.broadcast %52 : vector<1x16xf32> to vector<64x16xf32>
    %54 = arith.mulf %51, %53 : vector<64x16xf32>
    %55 = arith.addf %50, %54 : vector<64x16xf32>
    %c9 = arith.constant 9 : index
    %c0_24 = arith.constant 0 : index
    %56 = vector.load %arg8[%c9, %c0_24] : memref<96x16xf32, #tpu.memory_space<vmem>>, vector<64x16xf32>
    %57 = vector.broadcast %42 : vector<64x1xf32> to vector<64x16xf32>
    %58 = arith.mulf %56, %57 : vector<64x16xf32>
    %c2 = arith.constant 2 : index
    %c0_25 = arith.constant 0 : index
    %59 = vector.load %arg2[%c2, %c0_25] : memref<9x16xf32, #tpu.memory_space<vmem>>, vector<1x16xf32>
    %60 = vector.broadcast %59 : vector<1x16xf32> to vector<64x16xf32>
    %61 = arith.mulf %58, %60 : vector<64x16xf32>
    %62 = arith.addf %55, %61 : vector<64x16xf32>
    %c15 = arith.constant 15 : index
    %c0_26 = arith.constant 0 : index
    %63 = vector.load %arg8[%c15, %c0_26] : memref<96x16xf32, #tpu.memory_space<vmem>>, vector<64x16xf32>
    %64 = vector.broadcast %38 : vector<64x1xf32> to vector<64x16xf32>
    %65 = arith.mulf %63, %64 : vector<64x16xf32>
    %c3 = arith.constant 3 : index
    %c0_27 = arith.constant 0 : index
    %66 = vector.load %arg2[%c3, %c0_27] : memref<9x16xf32, #tpu.memory_space<vmem>>, vector<1x16xf32>
    %67 = vector.broadcast %66 : vector<1x16xf32> to vector<64x16xf32>
    %68 = arith.mulf %65, %67 : vector<64x16xf32>
    %69 = arith.addf %62, %68 : vector<64x16xf32>
    %c16_28 = arith.constant 16 : index
    %c0_29 = arith.constant 0 : index
    %70 = vector.load %arg8[%c16_28, %c0_29] : memref<96x16xf32, #tpu.memory_space<vmem>>, vector<64x16xf32>
    %c4 = arith.constant 4 : index
    %c0_30 = arith.constant 0 : index
    %71 = vector.load %arg2[%c4, %c0_30] : memref<9x16xf32, #tpu.memory_space<vmem>>, vector<1x16xf32>
    %72 = vector.broadcast %71 : vector<1x16xf32> to vector<64x16xf32>
    %73 = arith.mulf %70, %72 : vector<64x16xf32>
    %74 = arith.addf %69, %73 : vector<64x16xf32>
    %c17 = arith.constant 17 : index
    %c0_31 = arith.constant 0 : index
    %75 = vector.load %arg8[%c17, %c0_31] : memref<96x16xf32, #tpu.memory_space<vmem>>, vector<64x16xf32>
    %76 = vector.broadcast %42 : vector<64x1xf32> to vector<64x16xf32>
    %77 = arith.mulf %75, %76 : vector<64x16xf32>
    %c5 = arith.constant 5 : index
    %c0_32 = arith.constant 0 : index
    %78 = vector.load %arg2[%c5, %c0_32] : memref<9x16xf32, #tpu.memory_space<vmem>>, vector<1x16xf32>
    %79 = vector.broadcast %78 : vector<1x16xf32> to vector<64x16xf32>
    %80 = arith.mulf %77, %79 : vector<64x16xf32>
    %81 = arith.addf %74, %80 : vector<64x16xf32>
    %c23 = arith.constant 23 : index
    %c0_33 = arith.constant 0 : index
    %82 = vector.load %arg8[%c23, %c0_33] : memref<96x16xf32, #tpu.memory_space<vmem>>, vector<64x16xf32>
    %83 = vector.broadcast %38 : vector<64x1xf32> to vector<64x16xf32>
    %84 = arith.mulf %82, %83 : vector<64x16xf32>
    %c6 = arith.constant 6 : index
    %c0_34 = arith.constant 0 : index
    %85 = vector.load %arg2[%c6, %c0_34] : memref<9x16xf32, #tpu.memory_space<vmem>>, vector<1x16xf32>
    %86 = vector.broadcast %85 : vector<1x16xf32> to vector<64x16xf32>
    %87 = arith.mulf %84, %86 : vector<64x16xf32>
    %88 = arith.addf %81, %87 : vector<64x16xf32>
    %c24 = arith.constant 24 : index
    %c0_35 = arith.constant 0 : index
    %89 = vector.load %arg8[%c24, %c0_35] : memref<96x16xf32, #tpu.memory_space<vmem>>, vector<64x16xf32>
    %c7_36 = arith.constant 7 : index
    %c0_37 = arith.constant 0 : index
    %90 = vector.load %arg2[%c7_36, %c0_37] : memref<9x16xf32, #tpu.memory_space<vmem>>, vector<1x16xf32>
    %91 = vector.broadcast %90 : vector<1x16xf32> to vector<64x16xf32>
    %92 = arith.mulf %89, %91 : vector<64x16xf32>
    %93 = arith.addf %88, %92 : vector<64x16xf32>
    %c25 = arith.constant 25 : index
    %c0_38 = arith.constant 0 : index
    %94 = vector.load %arg8[%c25, %c0_38] : memref<96x16xf32, #tpu.memory_space<vmem>>, vector<64x16xf32>
    %95 = vector.broadcast %42 : vector<64x1xf32> to vector<64x16xf32>
    %96 = arith.mulf %94, %95 : vector<64x16xf32>
    %c8_39 = arith.constant 8 : index
    %c0_40 = arith.constant 0 : index
    %97 = vector.load %arg2[%c8_39, %c0_40] : memref<9x16xf32, #tpu.memory_space<vmem>>, vector<1x16xf32>
    %98 = vector.broadcast %97 : vector<1x16xf32> to vector<64x16xf32>
    %99 = arith.mulf %96, %98 : vector<64x16xf32>
    %100 = arith.addf %93, %99 : vector<64x16xf32>
    %c0_41 = arith.constant 0 : index
    %c0_42 = arith.constant 0 : index
    %c0_43 = arith.constant 0 : index
    %101 = vector.load %arg6[%c0_41, %c0_42, %c0_43] : memref<1x64x16xf32, #tpu.memory_space<vmem>>, vector<1x64x16xf32>
    %102 = vector.shape_cast %101 : vector<1x64x16xf32> to vector<64x16xf32>
    %103 = vector.shape_cast %100 : vector<64x16xf32> to vector<1x64x16xf32>
    tpu.vector_store %arg6[%c0_41, %c0_42, %c0_43], %103 {strides = array<i32>} : memref<1x64x16xf32, #tpu.memory_space<vmem>>, vector<1x64x16xf32>,
    %cst_44 = arith.constant dense<0.000000e+00> : vector<16xf32>
    %104 = vector.multi_reduction <add>, %100, %cst_44 [0] : vector<64x16xf32> to vector<16xf32>
    %105 = vector.shape_cast %104 : vector<16xf32> to vector<1x16xf32>
    %106 = arith.mulf %100, %100 : vector<64x16xf32>
    %cst_45 = arith.constant dense<0.000000e+00> : vector<16xf32>
    %107 = vector.multi_reduction <add>, %106, %cst_45 [0] : vector<64x16xf32> to vector<16xf32>
    %108 = vector.shape_cast %107 : vector<16xf32> to vector<1x16xf32>
    %109 = tpu.concatenate %105, %108 in 0 : vector<1x16xf32>, vector<1x16xf32> -> vector<2x16xf32>
    %c0_46 = arith.constant 0 : index
    %c0_47 = arith.constant 0 : index
    %c0_48 = arith.constant 0 : index
    %110 = vector.load %arg7[%c0_46, %c0_47, %c0_48] : memref<1x2x16xf32, #tpu.memory_space<vmem>>, vector<1x2x16xf32>
    %111 = vector.shape_cast %110 : vector<1x2x16xf32> to vector<2x16xf32>
    %112 = vector.shape_cast %109 : vector<2x16xf32> to vector<1x2x16xf32>
    tpu.vector_store %arg7[%c0_46, %c0_47, %c0_48], %112 {strides = array<i32>} : memref<1x2x16xf32, #tpu.memory_space<vmem>>, vector<1x2x16xf32>,
    return
  }
  func.func @transform_0(%arg0: i32) -> (i32, i32, i32) {
    %c0_i32 = arith.constant 0 : i32
    %c0_i32_0 = arith.constant 0 : i32
    %c0_i32_1 = arith.constant 0 : i32
    return %arg0, %c0_i32, %c0_i32_0 : i32, i32, i32
  }
  func.func @transform_1(%arg0: i32) -> (i32, i32) {
    %c0_i32 = arith.constant 0 : i32
    %c0_i32_0 = arith.constant 0 : i32
    %c0_i32_1 = arith.constant 0 : i32
    return %c0_i32, %c0_i32_0 : i32, i32
  }
  func.func @transform_2(%arg0: i32) -> (i32, i32) {
    %c0_i32 = arith.constant 0 : i32
    %c0_i32_0 = arith.constant 0 : i32
    %c0_i32_1 = arith.constant 0 : i32
    return %c0_i32, %c0_i32_0 : i32, i32
  }
  func.func @transform_3(%arg0: i32) -> (i32, i32) {
    %c0_i32 = arith.constant 0 : i32
    %c0_i32_0 = arith.constant 0 : i32
    %c0_i32_1 = arith.constant 0 : i32
    return %c0_i32, %c0_i32_0 : i32, i32
  }
  func.func @transform_4(%arg0: i32) -> (i32, i32, i32) {
    %c0_i32 = arith.constant 0 : i32
    %c0_i32_0 = arith.constant 0 : i32
    %c0_i32_1 = arith.constant 0 : i32
    return %arg0, %c0_i32, %c0_i32_0 : i32, i32, i32
  }
  func.func @transform_5(%arg0: i32) -> (i32, i32, i32) {
    %c0_i32 = arith.constant 0 : i32
    %c0_i32_0 = arith.constant 0 : i32
    %c0_i32_1 = arith.constant 0 : i32
    return %arg0, %c0_i32, %c0_i32_0 : i32, i32, i32
  }
  func.func @transform_6(%arg0: i32) -> (i32, i32, i32) {
    %c0_i32 = arith.constant 0 : i32
    %c0_i32_0 = arith.constant 0 : i32
    %c0_i32_1 = arith.constant 0 : i32
    return %arg0, %c0_i32, %c0_i32_0 : i32, i32, i32
  }
}

</mosaic_0001>

<llo_original>
// kernel: ghost_mlp_forward.7
$region0: #{ghost_mlp_forward.7}
  #allocation0 [shape = 'u32[]', space=smem, size = 0x4, offset = 0x4, fixed_abs, tag = 'smem constant byte address 0x4 - core index']
  #allocation1 [shape = 'u32[144,128]{1,0:T(1,128)}', space=vmem, size = 0x12000, scoped, tag = 'internal scratch']
  %s0 = inlined_call_operand.vmem [shape: f32[128,16], index: 0, kind: input, shape index: {}]
  %s1 = inlined_call_operand.vmem [shape: f32[1,16], index: 1, kind: input, shape index: {}]
  %s2 = inlined_call_operand.vmem [shape: f32[1,16], index: 2, kind: input, shape index: {}]
  %s3 = inlined_call_operand.vmem [shape: f32[128,16], index: 3, kind: output, shape index: {}]
  %s4 = sld [smem:[#allocation0]]
  $region45: #{ghost_mlp_forward.7} parent=0
    _
  %s6 = ssub.s32 1, %s4
  %s7 = scalar_select 0, %s6, %s4
  loop: start=0, step=1, limit=6
  $region2: #{ghost_mlp_forward.7} parent=0 // loop_pre_header
    _
  $region3: #{ghost_mlp_forward.7} parent=0 // loop_header
    %s9 = sphi 0, %s13
    %p10 = scmp.ge.s32.totalorder %s9, 6
    %s19 = sphi 0, %s21
    %s22 = sphi 0, %s19
    %s23 = sphi 0, %s22
    %s39 = sphi 0, %s23
    %s43 = sphi 0, %s43
    %s45 = sphi 0, %s43
    %s46 = sphi 0, %s45
    %s60 = sphi 0, %s46
    %s64 = sphi 0, %s64
    %s66 = sphi 0, %s64
    %s67 = sphi 0, %s66
    %s81 = sphi 0, %s67
    %s87 = sphi 0, %s89
    %s90 = sphi 0, %s87
    %s91 = sphi 0, %s90
    %s107 = sphi 0, %s91
  $region4: #{ghost_mlp_forward.7} parent=0 // loop_header_branch
    %12 = sbr.rel (%p10) target = $region8
  $region5: #{ghost_mlp_forward.7} parent=0 // loop_body
    %s14 = ssub.s32 %s9, 1
    %s15 = ssub.s32 %s9, 2
    %s16 = sadd.s32 %s9, 1
    %s17 = ssub.s32 %s9, %s16
    %p18 = scmp.eq.s32.totalorder %s17, 0
    %s20 = sadd.s32 %s19, 1
    %s21 = scalar_select %p18, %s19, %s20
    %p24 = pneg %p18
    %p25 = scmp.eq.s32.totalorder %s9, 3
    %p26 = por %p24, %p25
    %p27 = scmp.ne.s32.totalorder %s19, %s22
    %p28 = scmp.eq.s32.totalorder %s9, 0
    %p29 = por %p27, %p28
    %p30 = scmp.ne.s32.totalorder %s19, %s22
    %p31 = scmp.eq.s32.totalorder %s14, 3
    %p32 = por %p30, %p31
    %p33 = scmp.ne.s32.totalorder %s22, %s23
    %p34 = scmp.eq.s32.totalorder %s14, 0
    %p35 = por %p33, %p34
    %p36 = scmp.ne.s32.totalorder %s22, %s23
    %p37 = scmp.eq.s32.totalorder %s15, 3
    %p38 = por %p36, %p37
    %p40 = scmp.ne.s32.totalorder %s23, %s39
    %p41 = scmp.eq.s32.totalorder %s15, 0
    %p42 = por %p40, %p41
    %s44 = sadd.s32 %s43, 1
    %p47 = scmp.eq.s32.totalorder %s9, 3
    %p48 = scmp.ne.s32.totalorder %s43, %s45
    %p49 = scmp.eq.s32.totalorder %s9, 0
    %p50 = por %p48, %p49
    %p51 = scmp.ne.s32.totalorder %s43, %s45
    %p52 = scmp.eq.s32.totalorder %s14, 3
    %p53 = por %p51, %p52
    %p54 = scmp.ne.s32.totalorder %s45, %s46
    %p55 = scmp.eq.s32.totalorder %s14, 0
    %p56 = por %p54, %p55
    %p57 = scmp.ne.s32.totalorder %s45, %s46
    %p58 = scmp.eq.s32.totalorder %s15, 3
    %p59 = por %p57, %p58
    %p61 = scmp.ne.s32.totalorder %s46, %s60
    %p62 = scmp.eq.s32.totalorder %s15, 0
    %p63 = por %p61, %p62
    %s65 = sadd.s32 %s64, 1
    %p68 = scmp.eq.s32.totalorder %s9, 3
    %p69 = scmp.ne.s32.totalorder %s64, %s66
    %p70 = scmp.eq.s32.totalorder %s9, 0
    %p71 = por %p69, %p70
    %p72 = scmp.ne.s32.totalorder %s64, %s66
    %p73 = scmp.eq.s32.totalorder %s14, 3
    %p74 = por %p72, %p73
    %p75 = scmp.ne.s32.totalorder %s66, %s67
    %p76 = scmp.eq.s32.totalorder %s14, 0
    %p77 = por %p75, %p76
    %p78 = scmp.ne.s32.totalorder %s66, %s67
    %p79 = scmp.eq.s32.totalorder %s15, 3
    %p80 = por %p78, %p79
    %p82 = scmp.ne.s32.totalorder %s67, %s81
    %p83 = scmp.eq.s32.totalorder %s15, 0
    %p84 = por %p82, %p83
    %s85 = ssub.s32 %s9, %s16
    %p86 = scmp.eq.s32.totalorder %s85, 0
    %s88 = sadd.s32 %s87, 1
    %s89 = scalar_select %p86, %s87, %s88
    %p92 = pneg %p86
    %p93 = scmp.eq.s32.totalorder %s9, 3
    %p94 = por %p92, %p93
    %p95 = scmp.ne.s32.totalorder %s87, %s90
    %p96 = scmp.eq.s32.totalorder %s9, 0
    %p97 = por %p95, %p96
    %p98 = scmp.ne.s32.totalorder %s87, %s90
    %p99 = scmp.eq.s32.totalorder %s14, 3
    %p100 = por %p98, %p99
    %p101 = scmp.ne.s32.totalorder %s90, %s91
    %p102 = scmp.eq.s32.totalorder %s14, 0
    %p103 = por %p101, %p102
    %p104 = scmp.ne.s32.totalorder %s90, %s91
    %p105 = scmp.eq.s32.totalorder %s15, 3
    %p106 = por %p104, %p105
    %p108 = scmp.ne.s32.totalorder %s91, %s107
    %p109 = scmp.eq.s32.totalorder %s15, 0
    %p110 = por %p108, %p109
    %p111 = scmp.le.s32.totalorder 1, %s9
    %p112 = scmp.lt.s32.totalorder %s9, 5
    %p113 = pnand %p111, %p112
    %p114 = pneg %p113
    // Predicated region
    $region9: #{ghost_mlp_forward.7} parent=5 // pred_check
      _
    $region10: #{ghost_mlp_forward.7} parent=5 // pred_check_branch
      %116 = sbr.rel (%p113) target = $region12
    $region11: #{ghost_mlp_forward.7} parent=5 // pred_region
      %s117 = ssub.s32 %s9, 1
      // Predicated region
      $region13: #{ghost_mlp_forward.7} parent=11 // pred_check
        %p118 = pneg %p56
      $region14: #{ghost_mlp_forward.7} parent=11 // pred_check_branch
        %120 = sbr.rel (%p118) target = $region16
      $region15: #{ghost_mlp_forward.7} parent=11 // pred_region
        _
      $region16: #{ghost_mlp_forward.7} parent=11 // pred_fallthru
        _
      // Predicated region
      $region17: #{ghost_mlp_forward.7} parent=11 // pred_check
        %p121 = pneg %p77
      $region18: #{ghost_mlp_forward.7} parent=11 // pred_check_branch
        %123 = sbr.rel (%p121) target = $region20
      $region19: #{ghost_mlp_forward.7} parent=11 // pred_region
        _
      $region20: #{ghost_mlp_forward.7} parent=11 // pred_fallthru
        _
    $region12: #{ghost_mlp_forward.7} parent=5 // pred_fallthru
      _
    %p124 = scmp.lt.s32.totalorder %s9, 4
    // Predicated region
    $region21: #{ghost_mlp_forward.7} parent=5 // pred_check
      %p125 = pneg %p124
    $region22: #{ghost_mlp_forward.7} parent=5 // pred_check_branch
      %127 = sbr.rel (%p125) target = $region24
    $region23: #{ghost_mlp_forward.7} parent=5 // pred_region
      // Predicated region
      $region25: #{ghost_mlp_forward.7} parent=23 // pred_check
        %p128 = pneg %p29
      $region26: #{ghost_mlp_forward.7} parent=23 // pred_check_branch
        %130 = sbr.rel (%p128) target = $region28
      $region27: #{ghost_mlp_forward.7} parent=23 // pred_region
        %s131 = smul.u32 4, %s9
        %p132 = scmp.lt.s32.totalorder %s131, 15
        %s133 = scalar_select %p132, %s131, 15
        %s134 = smul.addr %s133, 8
        %s135 = scalar_lea.vmem %s0, %s134
        %s136 = smul.u32 4, %s9
      $region28: #{ghost_mlp_forward.7} parent=23 // pred_fallthru
        _
    $region24: #{ghost_mlp_forward.7} parent=5 // pred_fallthru
      _
    %p137 = scmp.le.s32.totalorder 1, %s9
    %p138 = scmp.lt.s32.totalorder %s9, 5
    %p139 = pnand %p137, %p138
    %p140 = pneg %p139
    // Predicated region
    $region29: #{ghost_mlp_forward.7} parent=5 // pred_check
      _
    $region30: #{ghost_mlp_forward.7} parent=5 // pred_check_branch
      %142 = sbr.rel (%p139) target = $region32
    $region31: #{ghost_mlp_forward.7} parent=5 // pred_region
      %s143 = ssub.s32 %s9, 1
      %s144 = smul.u32 4, %s14
      %p145 = scmp.lt.s32.totalorder %s144, 15
      %s146 = scalar_select %p145, %s144, 15
      %s147 = smul.addr %s146, 8
      %s148 = scalar_lea.vmem %s0, %s147
      %p149 = pneg %p35
      %p150 = pneg %p32
      %p151 = pneg %p56
      %p152 = pneg %p53
      %p153 = pneg %p77
      %p154 = pneg %p74
      %p155 = pneg %p103
      %p156 = pneg %p100
      %s157 = smul.u32 4, %s14
      %p158 = scmp.lt.s32.totalorder %s157, 15
      %s159 = scalar_select %p158, %s157, 15
      %s160 = smul.addr %s159, 8
      %s161 = scalar_lea.vmem %s3, %s160
      %s162 = smul.u32 4, %s14
      %p163 = scmp.lt.s32.totalorder %s162, 15
      %s164 = scalar_select %p163, %s162, 15
      %s165 = smul.addr %s164, 8
      %s166 = scalar_lea.vmem %s0, %s165
      %s167 = smul.u32 4, %s14
      %s168 = smul.u32 4, %s14
      %p169 = scmp.lt.s32.totalorder %s168, 15
      %s170 = scalar_select %p169, %s168, 15
      %s171 = smul.addr %s170, 8
      %s172 = scalar_lea.vmem %s3, %s171
      %s173 = smul.u32 4, %s14
      %v174 = vld [vmem:[%s166] sm:$0xff]
      %v175 = vld [vmem:[%s166 + $0x8] sm:$0xff]
      %v176 = vld [vmem:[%s166 + $0x10] sm:$0xff]
      %v177 = vld [vmem:[%s166 + $0x18] sm:$0xff]
      %v178 = vld [vmem:[%s1] sm:$0x1]
      %v180 = vlaneseq
      %v181 = vshrl.u32 %v180, 7
      %v182 = vsub.s32 0, %v181
      %v183 = vrot.slane %v178, %v182
      %v185 = vmul.f32 %v174, %v183
      %v186 = vmul.f32 %v175, %v183
      %v187 = vmul.f32 %v176, %v183
      %v188 = vmul.f32 %v177, %v183
      %v189 = vld [vmem:[%s2] sm:$0x1]
      %v191 = vlaneseq
      %v192 = vshrl.u32 %v191, 7
      %v193 = vsub.s32 0, %v192
      %v194 = vrot.slane %v189, %v193
      %v196 = vadd.f32 %v185, %v194
      %v197 = vadd.f32 %v186, %v194
      %v198 = vadd.f32 %v187, %v194
      %v199 = vadd.f32 %v188, %v194
      %vm200 = vcmask 130048
      %201 = vst.msk [vmem:[%s172] sm:$0xff] %vm200, %v196
      %202 = vst.msk [vmem:[%s172 + $0x8] sm:$0xff] %vm200, %v197
      %203 = vst.msk [vmem:[%s172 + $0x10] sm:$0xff] %vm200, %v198
      %204 = vst.msk [vmem:[%s172 + $0x18] sm:$0xff] %vm200, %v199
      %s205 = smul.u32 4, %s14
      %p206 = scmp.lt.s32.totalorder %s205, 15
      %s207 = scalar_select %p206, %s205, 15
      %s208 = smul.addr %s207, 8
      %s209 = scalar_lea.vmem %s3, %s208
      // Predicated region
      $region33: #{ghost_mlp_forward.7} parent=31 // pred_check
        %p210 = pneg %p100
      $region34: #{ghost_mlp_forward.7} parent=31 // pred_check_branch
        %212 = sbr.rel (%p210) target = $region36
      $region35: #{ghost_mlp_forward.7} parent=31 // pred_region
        %s213 = smul.u32 4, %s14
      $region36: #{ghost_mlp_forward.7} parent=31 // pred_fallthru
        _
    $region32: #{ghost_mlp_forward.7} parent=5 // pred_fallthru
      _
    %p214 = scmp.le.s32.totalorder 2, %s9
    // Predicated region
    $region37: #{ghost_mlp_forward.7} parent=5 // pred_check
      %p215 = pneg %p214
    $region38: #{ghost_mlp_forward.7} parent=5 // pred_check_branch
      %217 = sbr.rel (%p215) target = $region40
    $region39: #{ghost_mlp_forward.7} parent=5 // pred_region
      %s218 = ssub.s32 %s9, 2
      // Predicated region
      $region41: #{ghost_mlp_forward.7} parent=39 // pred_check
        %p219 = pneg %p106
      $region42: #{ghost_mlp_forward.7} parent=39 // pred_check_branch
        %221 = sbr.rel (%p219) target = $region44
      $region43: #{ghost_mlp_forward.7} parent=39 // pred_region
        %s222 = smul.u32 4, %s15
        %p223 = scmp.lt.s32.totalorder %s222, 15
        %s224 = scalar_select %p223, %s222, 15
        %s225 = smul.addr %s224, 8
        %s226 = scalar_lea.vmem %s3, %s225
      $region44: #{ghost_mlp_forward.7} parent=39 // pred_fallthru
        _
    $region40: #{ghost_mlp_forward.7} parent=5 // pred_fallthru
      _
  $region6: #{ghost_mlp_forward.7} parent=0 // loop_footer
    %s13 = sadd.s32 1, %s9
  $region7: #{ghost_mlp_forward.7} parent=0 // loop_footer_branch
    %8 = sbr.rel target = $region3
  $region8: #{ghost_mlp_forward.7} parent=0 // loop_exit
    _

// kernel: ghost_mlp_forward.6
$region0: #{ghost_mlp_forward.6}
  #allocation0 [shape = 'u32[]', space=smem, size = 0x4, offset = 0x4, fixed_abs, tag = 'smem constant byte address 0x4 - core index']
  #allocation1 [shape = 'u32[144,128]{1,0:T(1,128)}', space=vmem, size = 0x12000, scoped, tag = 'internal scratch']
  %s0 = inlined_call_operand.vmem [shape: bf16[128,16], index: 0, kind: input, shape index: {}]
  %s1 = inlined_call_operand.vmem [shape: f32[128,16], index: 1, kind: input, shape index: {}]
  %s2 = inlined_call_operand.vmem [shape: f32[1,16], index: 2, kind: input, shape index: {}]
  %s3 = inlined_call_operand.vmem [shape: f32[1,16], index: 3, kind: input, shape index: {}]
  %s4 = inlined_call_operand.vmem [shape: bf16[16,16], index: 4, kind: input, shape index: {}]
  %s5 = inlined_call_operand.vmem [shape: bf16[16,16], index: 5, kind: input, shape index: {}]
  %s6 = inlined_call_operand.vmem [shape: f32[128,16], index: 6, kind: output, shape index: {0}]
  %s7 = inlined_call_operand.vmem [shape: f32[4,2,16], index: 7, kind: output, shape index: {1}]
  %8 = xla_tuple %s6, %s7
  %s9 = sld [smem:[#allocation0]]
  $region65: #{ghost_mlp_forward.6} parent=0
    _
  %s11 = ssub.s32 1, %s9
  %s12 = scalar_select 0, %s11, %s9
  loop: start=0, step=1, limit=6
  $region2: #{ghost_mlp_forward.6} parent=0 // loop_pre_header
    _
  $region3: #{ghost_mlp_forward.6} parent=0 // loop_header
    %s14 = sphi 0, %s18
    %p15 = scmp.ge.s32.totalorder %s14, 6
    %s24 = sphi 0, %s26
    %s27 = sphi 0, %s24
    %s28 = sphi 0, %s27
    %s44 = sphi 0, %s28
    %s50 = sphi 0, %s52
    %s53 = sphi 0, %s50
    %s54 = sphi 0, %s53
    %s70 = sphi 0, %s54
    %s74 = sphi 0, %s74
    %s76 = sphi 0, %s74
    %s77 = sphi 0, %s76
    %s91 = sphi 0, %s77
    %s95 = sphi 0, %s95
    %s97 = sphi 0, %s95
    %s98 = sphi 0, %s97
    %s112 = sphi 0, %s98
    %s116 = sphi 0, %s116
    %s118 = sphi 0, %s116
    %s119 = sphi 0, %s118
    %s133 = sphi 0, %s119
    %s137 = sphi 0, %s137
    %s139 = sphi 0, %s137
    %s140 = sphi 0, %s139
    %s154 = sphi 0, %s140
    %s160 = sphi 0, %s162
    %s163 = sphi 0, %s160
    %s164 = sphi 0, %s163
    %s180 = sphi 0, %s164
    %s186 = sphi 0, %s188
    %s189 = sphi 0, %s186
    %s190 = sphi 0, %s189
    %s206 = sphi 0, %s190
  $region4: #{ghost_mlp_forward.6} parent=0 // loop_header_branch
    %17 = sbr.rel (%p15) target = $region8
  $region5: #{ghost_mlp_forward.6} parent=0 // loop_body
    %s19 = ssub.s32 %s14, 1
    %s20 = ssub.s32 %s14, 2
    %s21 = sadd.s32 %s14, 1
    %s22 = ssub.s32 %s14, %s21
    %p23 = scmp.eq.s32.totalorder %s22, 0
    %s25 = sadd.s32 %s24, 1
    %s26 = scalar_select %p23, %s24, %s25
    %p29 = pneg %p23
    %p30 = scmp.eq.s32.totalorder %s14, 3
    %p31 = por %p29, %p30
    %p32 = scmp.ne.s32.totalorder %s24, %s27
    %p33 = scmp.eq.s32.totalorder %s14, 0
    %p34 = por %p32, %p33
    %p35 = scmp.ne.s32.totalorder %s24, %s27
    %p36 = scmp.eq.s32.totalorder %s19, 3
    %p37 = por %p35, %p36
    %p38 = scmp.ne.s32.totalorder %s27, %s28
    %p39 = scmp.eq.s32.totalorder %s19, 0
    %p40 = por %p38, %p39
    %p41 = scmp.ne.s32.totalorder %s27, %s28
    %p42 = scmp.eq.s32.totalorder %s20, 3
    %p43 = por %p41, %p42
    %p45 = scmp.ne.s32.totalorder %s28, %s44
    %p46 = scmp.eq.s32.totalorder %s20, 0
    %p47 = por %p45, %p46
    %s48 = ssub.s32 %s14, %s21
    %p49 = scmp.eq.s32.totalorder %s48, 0
    %s51 = sadd.s32 %s50, 1
    %s52 = scalar_select %p49, %s50, %s51
    %p55 = pneg %p49
    %p56 = scmp.eq.s32.totalorder %s14, 3
    %p57 = por %p55, %p56
    %p58 = scmp.ne.s32.totalorder %s50, %s53
    %p59 = scmp.eq.s32.totalorder %s14, 0
    %p60 = por %p58, %p59
    %p61 = scmp.ne.s32.totalorder %s50, %s53
    %p62 = scmp.eq.s32.totalorder %s19, 3
    %p63 = por %p61, %p62
    %p64 = scmp.ne.s32.totalorder %s53, %s54
    %p65 = scmp.eq.s32.totalorder %s19, 0
    %p66 = por %p64, %p65
    %p67 = scmp.ne.s32.totalorder %s53, %s54
    %p68 = scmp.eq.s32.totalorder %s20, 3
    %p69 = por %p67, %p68
    %p71 = scmp.ne.s32.totalorder %s54, %s70
    %p72 = scmp.eq.s32.totalorder %s20, 0
    %p73 = por %p71, %p72
    %s75 = sadd.s32 %s74, 1
    %p78 = scmp.eq.s32.totalorder %s14, 3
    %p79 = scmp.ne.s32.totalorder %s74, %s76
    %p80 = scmp.eq.s32.totalorder %s14, 0
    %p81 = por %p79, %p80
    %p82 = scmp.ne.s32.totalorder %s74, %s76
    %p83 = scmp.eq.s32.totalorder %s19, 3
    %p84 = por %p82, %p83
    %p85 = scmp.ne.s32.totalorder %s76, %s77
    %p86 = scmp.eq.s32.totalorder %s19, 0
    %p87 = por %p85, %p86
    %p88 = scmp.ne.s32.totalorder %s76, %s77
    %p89 = scmp.eq.s32.totalorder %s20, 3
    %p90 = por %p88, %p89
    %p92 = scmp.ne.s32.totalorder %s77, %s91
    %p93 = scmp.eq.s32.totalorder %s20, 0
    %p94 = por %p92, %p93
    %s96 = sadd.s32 %s95, 1
    %p99 = scmp.eq.s32.totalorder %s14, 3
    %p100 = scmp.ne.s32.totalorder %s95, %s97
    %p101 = scmp.eq.s32.totalorder %s14, 0
    %p102 = por %p100, %p101
    %p103 = scmp.ne.s32.totalorder %s95, %s97
    %p104 = scmp.eq.s32.totalorder %s19, 3
    %p105 = por %p103, %p104
    %p106 = scmp.ne.s32.totalorder %s97, %s98
    %p107 = scmp.eq.s32.totalorder %s19, 0
    %p108 = por %p106, %p107
    %p109 = scmp.ne.s32.totalorder %s97, %s98
    %p110 = scmp.eq.s32.totalorder %s20, 3
    %p111 = por %p109, %p110
    %p113 = scmp.ne.s32.totalorder %s98, %s112
    %p114 = scmp.eq.s32.totalorder %s20, 0
    %p115 = por %p113, %p114
    %s117 = sadd.s32 %s116, 1
    %p120 = scmp.eq.s32.totalorder %s14, 3
    %p121 = scmp.ne.s32.totalorder %s116, %s118
    %p122 = scmp.eq.s32.totalorder %s14, 0
    %p123 = por %p121, %p122
    %p124 = scmp.ne.s32.totalorder %s116, %s118
    %p125 = scmp.eq.s32.totalorder %s19, 3
    %p126 = por %p124, %p125
    %p127 = scmp.ne.s32.totalorder %s118, %s119
    %p128 = scmp.eq.s32.totalorder %s19, 0
    %p129 = por %p127, %p128
    %p130 = scmp.ne.s32.totalorder %s118, %s119
    %p131 = scmp.eq.s32.totalorder %s20, 3
    %p132 = por %p130, %p131
    %p134 = scmp.ne.s32.totalorder %s119, %s133
    %p135 = scmp.eq.s32.totalorder %s20, 0
    %p136 = por %p134, %p135
    %s138 = sadd.s32 %s137, 1
    %p141 = scmp.eq.s32.totalorder %s14, 3
    %p142 = scmp.ne.s32.totalorder %s137, %s139
    %p143 = scmp.eq.s32.totalorder %s14, 0
    %p144 = por %p142, %p143
    %p145 = scmp.ne.s32.totalorder %s137, %s139
    %p146 = scmp.eq.s32.totalorder %s19, 3
    %p147 = por %p145, %p146
    %p148 = scmp.ne.s32.totalorder %s139, %s140
    %p149 = scmp.eq.s32.totalorder %s19, 0
    %p150 = por %p148, %p149
    %p151 = scmp.ne.s32.totalorder %s139, %s140
    %p152 = scmp.eq.s32.totalorder %s20, 3
    %p153 = por %p151, %p152
    %p155 = scmp.ne.s32.totalorder %s140, %s154
    %p156 = scmp.eq.s32.totalorder %s20, 0
    %p157 = por %p155, %p156
    %s158 = ssub.s32 %s14, %s21
    %p159 = scmp.eq.s32.totalorder %s158, 0
    %s161 = sadd.s32 %s160, 1
    %s162 = scalar_select %p159, %s160, %s161
    %p165 = pneg %p159
    %p166 = scmp.eq.s32.totalorder %s14, 3
    %p167 = por %p165, %p166
    %p168 = scmp.ne.s32.totalorder %s160, %s163
    %p169 = scmp.eq.s32.totalorder %s14, 0
    %p170 = por %p168, %p169
    %p171 = scmp.ne.s32.totalorder %s160, %s163
    %p172 = scmp.eq.s32.totalorder %s19, 3
    %p173 = por %p171, %p172
    %p174 = scmp.ne.s32.totalorder %s163, %s164
    %p175 = scmp.eq.s32.totalorder %s19, 0
    %p176 = por %p174, %p175
    %p177 = scmp.ne.s32.totalorder %s163, %s164
    %p178 = scmp.eq.s32.totalorder %s20, 3
    %p179 = por %p177, %p178
    %p181 = scmp.ne.s32.totalorder %s164, %s180
    %p182 = scmp.eq.s32.totalorder %s20, 0
    %p183 = por %p181, %p182
    %s184 = ssub.s32 %s14, %s21
    %p185 = scmp.eq.s32.totalorder %s184, 0
    %s187 = sadd.s32 %s186, 1
    %s188 = scalar_select %p185, %s186, %s187
    %p191 = pneg %p185
    %p192 = scmp.eq.s32.totalorder %s14, 3
    %p193 = por %p191, %p192
    %p194 = scmp.ne.s32.totalorder %s186, %s189
    %p195 = scmp.eq.s32.totalorder %s14, 0
    %p196 = por %p194, %p195
    %p197 = scmp.ne.s32.totalorder %s186, %s189
    %p198 = scmp.eq.s32.totalorder %s19, 3
    %p199 = por %p197, %p198
    %p200 = scmp.ne.s32.totalorder %s189, %s190
    %p201 = scmp.eq.s32.totalorder %s19, 0
    %p202 = por %p200, %p201
    %p203 = scmp.ne.s32.totalorder %s189, %s190
    %p204 = scmp.eq.s32.totalorder %s20, 3
    %p205 = por %p203, %p204
    %p207 = scmp.ne.s32.totalorder %s190, %s206
    %p208 = scmp.eq.s32.totalorder %s20, 0
    %p209 = por %p207, %p208
    %p210 = scmp.le.s32.totalorder 1, %s14
    %p211 = scmp.lt.s32.totalorder %s14, 5
    %p212 = pnand %p210, %p211
    %p213 = pneg %p212
    // Predicated region
    $region9: #{ghost_mlp_forward.6} parent=5 // pred_check
      _
    $region10: #{ghost_mlp_forward.6} parent=5 // pred_check_branch
      %215 = sbr.rel (%p212) target = $region12
    $region11: #{ghost_mlp_forward.6} parent=5 // pred_region
      %s216 = ssub.s32 %s14, 1
      // Predicated region
      $region13: #{ghost_mlp_forward.6} parent=11 // pred_check
        %p217 = pneg %p87
      $region14: #{ghost_mlp_forward.6} parent=11 // pred_check_branch
        %219 = sbr.rel (%p217) target = $region16
      $region15: #{ghost_mlp_forward.6} parent=11 // pred_region
        _
      $region16: #{ghost_mlp_forward.6} parent=11 // pred_fallthru
        _
      // Predicated region
      $region17: #{ghost_mlp_forward.6} parent=11 // pred_check
        %p220 = pneg %p108
      $region18: #{ghost_mlp_forward.6} parent=11 // pred_check_branch
        %222 = sbr.rel (%p220) target = $region20
      $region19: #{ghost_mlp_forward.6} parent=11 // pred_region
        _
      $region20: #{ghost_mlp_forward.6} parent=11 // pred_fallthru
        _
      // Predicated region
      $region21: #{ghost_mlp_forward.6} parent=11 // pred_check
        %p223 = pneg %p129
      $region22: #{ghost_mlp_forward.6} parent=11 // pred_check_branch
        %225 = sbr.rel (%p223) target = $region24
      $region23: #{ghost_mlp_forward.6} parent=11 // pred_region
        _
      $region24: #{ghost_mlp_forward.6} parent=11 // pred_fallthru
        _
      // Predicated region
      $region25: #{ghost_mlp_forward.6} parent=11 // pred_check
        %p226 = pneg %p150
      $region26: #{ghost_mlp_forward.6} parent=11 // pred_check_branch
        %228 = sbr.rel (%p226) target = $region28
      $region27: #{ghost_mlp_forward.6} parent=11 // pred_region
        _
      $region28: #{ghost_mlp_forward.6} parent=11 // pred_fallthru
        _
    $region12: #{ghost_mlp_forward.6} parent=5 // pred_fallthru
      _
    %p229 = scmp.lt.s32.totalorder %s14, 4
    // Predicated region
    $region29: #{ghost_mlp_forward.6} parent=5 // pred_check
      %p230 = pneg %p229
    $region30: #{ghost_mlp_forward.6} parent=5 // pred_check_branch
      %232 = sbr.rel (%p230) target = $region32
    $region31: #{ghost_mlp_forward.6} parent=5 // pred_region
      // Predicated region
      $region33: #{ghost_mlp_forward.6} parent=31 // pred_check
        %p233 = pneg %p34
      $region34: #{ghost_mlp_forward.6} parent=31 // pred_check_branch
        %235 = sbr.rel (%p233) target = $region36
      $region35: #{ghost_mlp_forward.6} parent=31 // pred_region
        %s236 = smul.u32 4, %s14
        %p237 = scmp.lt.s32.totalorder %s236, 15
        %s238 = scalar_select %p237, %s236, 15
        %s239 = smul.addr %s238, 4
        %s240 = scalar_lea.vmem %s0, %s239
        %s241 = smul.u32 4, %s14
      $region36: #{ghost_mlp_forward.6} parent=31 // pred_fallthru
        _
      // Predicated region
      $region37: #{ghost_mlp_forward.6} parent=31 // pred_check
        %p242 = pneg %p60
      $region38: #{ghost_mlp_forward.6} parent=31 // pred_check_branch
        %244 = sbr.rel (%p242) target = $region40
      $region39: #{ghost_mlp_forward.6} parent=31 // pred_region
        %s245 = smul.u32 4, %s14
        %p246 = scmp.lt.s32.totalorder %s245, 15
        %s247 = scalar_select %p246, %s245, 15
        %s248 = smul.addr %s247, 8
        %s249 = scalar_lea.vmem %s1, %s248
        %s250 = smul.u32 4, %s14
      $region40: #{ghost_mlp_forward.6} parent=31 // pred_fallthru
        _
    $region32: #{ghost_mlp_forward.6} parent=5 // pred_fallthru
      _
    %p251 = scmp.le.s32.totalorder 1, %s14
    %p252 = scmp.lt.s32.totalorder %s14, 5
    %p253 = pnand %p251, %p252
    %p254 = pneg %p253
    // Predicated region
    $region41: #{ghost_mlp_forward.6} parent=5 // pred_check
      _
    $region42: #{ghost_mlp_forward.6} parent=5 // pred_check_branch
      %256 = sbr.rel (%p253) target = $region44
    $region43: #{ghost_mlp_forward.6} parent=5 // pred_region
      %s257 = ssub.s32 %s14, 1
      %s258 = smul.u32 4, %s19
      %p259 = scmp.lt.s32.totalorder %s258, 15
      %s260 = scalar_select %p259, %s258, 15
      %s261 = smul.addr %s260, 4
      %s262 = scalar_lea.vmem %s0, %s261
      %p263 = pneg %p40
      %p264 = pneg %p37
      %s265 = smul.u32 4, %s19
      %p266 = scmp.lt.s32.totalorder %s265, 15
      %s267 = scalar_select %p266, %s265, 15
      %s268 = smul.addr %s267, 8
      %s269 = scalar_lea.vmem %s1, %s268
      %p270 = pneg %p66
      %p271 = pneg %p63
      %p272 = pneg %p87
      %p273 = pneg %p84
      %p274 = pneg %p108
      %p275 = pneg %p105
      %p276 = pneg %p129
      %p277 = pneg %p126
      %p278 = pneg %p150
      %p279 = pneg %p147
      %p280 = pneg %p176
      %p281 = pneg %p173
      %s282 = smul.u32 4, %s19
      %p283 = scmp.lt.s32.totalorder %s282, 15
      %s284 = scalar_select %p283, %s282, 15
      %s285 = smul.addr %s284, 8
      %s286 = scalar_lea.vmem %s6, %s285
      %p287 = pneg %p202
      %p288 = pneg %p199
      %p289 = scmp.lt.s32.totalorder %s19, 3
      %s290 = scalar_select %p289, %s19, 3
      %s291 = smul.addr %s290, 2
      %s292 = scalar_lea.vmem %s7, %s291
      %s293 = smul.u32 4, %s19
      %p294 = scmp.lt.s32.totalorder %s293, 15
      %s295 = scalar_select %p294, %s293, 15
      %s296 = smul.addr %s295, 4
      %s297 = scalar_lea.vmem %s0, %s296
      %s298 = smul.u32 4, %s19
      %s299 = smul.u32 4, %s19
      %p300 = scmp.lt.s32.totalorder %s299, 15
      %s301 = scalar_select %p300, %s299, 15
      %s302 = smul.addr %s301, 8
      %s303 = scalar_lea.vmem %s1, %s302
      %s304 = smul.u32 4, %s19
      %s305 = smul.u32 4, %s19
      %p306 = scmp.lt.s32.totalorder %s305, 15
      %s307 = scalar_select %p306, %s305, 15
      %s308 = smul.addr %s307, 8
      %s309 = scalar_lea.vmem %s6, %s308
      %s310 = smul.u32 4, %s19
      %p311 = scmp.lt.s32.totalorder %s19, 3
      %s312 = scalar_select %p311, %s19, 3
      %s313 = smul.addr %s312, 2
      %s314 = scalar_lea.vmem %s7, %s313
      %v316 = vld [vmem:[%s303] sm:$0xff]
      %v317 = vld [vmem:[%s303 + $0x8] sm:$0xff]
      %v318 = vld [vmem:[%s303 + $0x10] sm:$0xff]
      %v319 = vld [vmem:[%s303 + $0x18] sm:$0xff]
      %v320 = vld [vmem:[%s2] sm:$0x1]
      %v322 = vlaneseq
      %v323 = vshrl.u32 %v322, 7
      %v324 = vsub.s32 0, %v323
      %v325 = vrot.slane %v320, %v324
      %v327 = vmul.f32 %v316, %v325
      %v328 = vmul.f32 %v317, %v325
      %v329 = vmul.f32 %v318, %v325
      %v330 = vmul.f32 %v319, %v325
      %v331 = vld [vmem:[%s3] sm:$0x1]
      %v333 = vlaneseq
      %v334 = vshrl.u32 %v333, 7
      %v335 = vsub.s32 0, %v334
      %v336 = vrot.slane %v331, %v335
      %v338 = vadd.f32 %v327, %v336
      %v339 = vadd.f32 %v328, %v336
      %v340 = vadd.f32 %v329, %v336
      %v341 = vadd.f32 %v330, %v336
      %v342 = vmax.f32 %v338, 0.0
      %v343 = vmax.f32 %v339, 0.0
      %v344 = vmax.f32 %v340, 0.0
      %v345 = vmax.f32 %v341, 0.0
      %v346 = vld [vmem:[%s297] sm:$0xf]
      %v347 = vld [vmem:[%s297 + $0x4] sm:$0xf]
      %v348 = vld [vmem:[%s297 + $0x8] sm:$0xf]
      %v349 = vld [vmem:[%s297 + $0xc] sm:$0xf]
      %v350 = vld [vmem:[%s4] sm:$0xf]
      %v351 = vld [vmem:[%s4 + $0x4] sm:$0xf]
      %v352 = vpack.c.bf16 %v343, %v342
      %v353 = vpack.c.bf16 %v345, %v344
      %v354 = vld [vmem:[%s5] sm:$0xf]
      %v355 = vld [vmem:[%s5 + $0x4] sm:$0xf]
      %v358 = vunpack.c.l.b16 %v354
      %v359 = vunpack.c.l.b16 %v355
      %v360 = vpack.c.b16 %v359, %v358
      %vm362 = vcmask 130048
      %v364 = vsel %vm362, %v352, 0
      %v367 = vsel %vm362, %v353, 0
      %369 = vmatprep.subr.bf16.mxu0 0
      %370 = vmatpush1.bf16.msra.mxu0 0
      %371 = vmatprep.subr.bf16.mxu0 0
      %372 = vmatpush1.bf16.msra.mxu0 0
      %373 = vmatprep.subr.bf16.mxu0 0
      %374 = vmatpush1.bf16.msra.mxu0 0
      %375 = vmatprep.subr.bf16.mxu0 0
      %376 = vmatpush1.bf16.msra.mxu0 0
      %377 = vmatprep.subr.bf16.mxu0 0
      %378 = vmatpush1.bf16.msra.mxu0 0
      %379 = vmatprep.subr.bf16.mxu0 0
      %380 = vmatpush1.bf16.msra.mxu0 0
      %381 = vmatprep.subr.bf16.mxu0 0
      %382 = vmatpush1.bf16.msra.mxu0 0
      %383 = vmatprep.subr.bf16.mxu0 0
      %384 = vmatpush1.bf16.msra.mxu0 %v360
      %385 = vmatprep.subr.bf16.mxu0 0
      %386 = vmatpush2.bf16.msra.mxu0 0
      %387 = vmatprep.subr.bf16.mxu0 0
      %388 = vmatpush2.bf16.msra.mxu0 0
      %389 = vmatprep.subr.bf16.mxu0 0
      %390 = vmatpush2.bf16.msra.mxu0 0
      %391 = vmatprep.subr.bf16.mxu0 0
      %392 = vmatpush2.bf16.msra.mxu0 0
      %393 = vmatprep.subr.bf16.mxu0 0
      %394 = vmatpush2.bf16.msra.mxu0 0
      %395 = vmatprep.subr.bf16.mxu0 0
      %396 = vmatpush2.bf16.msra.mxu0 0
      %397 = vmatprep.subr.bf16.mxu0 0
      %398 = vmatpush2.bf16.msra.mxu0 0
      %399 = vmatprep.subr.bf16.mxu0 0
      %400 = vmatpush2.bf16.msra.mxu0 0
      %401 = vmatprep.mubr.bf16.mxu0 0
      %402 = vmatmul.mubr.bf16.gmra.mxu0 %v364
      %v403 = vpop.f32.mrf.mxu0
      %v404 = vadd.f32 0.0, %v403
      %v405 = vpop.f32.mrf.mxu0
      %v406 = vpop.f32.mrf.mxu0
      %v407 = vadd.f32 0.0, %v406
      %v408 = vpop.f32.mrf.mxu0
      %409 = vmatprep.mubr.bf16.mxu0 0
      %410 = vmatmul.mubr.bf16.gmra.mxu0 %v367
      %v411 = vpop.f32.mrf.mxu0
      %v412 = vadd.f32 0.0, %v411
      %v413 = vpop.f32.mrf.mxu0
      %v414 = vpop.f32.mrf.mxu0
      %v415 = vadd.f32 0.0, %v414
      %v416 = vpop.f32.mrf.mxu0
      %417 = vdwg.mxu0
      %v422 = vunpack.c.l.b16 %v346
      %v423 = vunpack.c.l.b16 %v347
      %v424 = vunpack.c.l.b16 %v348
      %v425 = vunpack.c.l.b16 %v349
      %v426 = vpack.c.b16 %v423, %v422
      %v427 = vpack.c.b16 %v425, %v424
      %v430 = vunpack.c.l.b16 %v350
      %v431 = vunpack.c.l.b16 %v351
      %v432 = vpack.c.b16 %v431, %v430
      %v435 = vsel %vm362, %v426, 0
      %v438 = vsel %vm362, %v427, 0
      %440 = vmatprep.subr.bf16.mxu0 0
      %441 = vmatpush1.bf16.msra.mxu0 0
      %442 = vmatprep.subr.bf16.mxu0 0
      %443 = vmatpush1.bf16.msra.mxu0 0
      %444 = vmatprep.subr.bf16.mxu0 0
      %445 = vmatpush1.bf16.msra.mxu0 0
      %446 = vmatprep.subr.bf16.mxu0 0
      %447 = vmatpush1.bf16.msra.mxu0 0
      %448 = vmatprep.subr.bf16.mxu0 0
      %449 = vmatpush1.bf16.msra.mxu0 0
      %450 = vmatprep.subr.bf16.mxu0 0
      %451 = vmatpush1.bf16.msra.mxu0 0
      %452 = vmatprep.subr.bf16.mxu0 0
      %453 = vmatpush1.bf16.msra.mxu0 0
      %454 = vmatprep.subr.bf16.mxu0 0
      %455 = vmatpush1.bf16.msra.mxu0 %v432
      %456 = vmatprep.subr.bf16.mxu0 0
      %457 = vmatpush2.bf16.msra.mxu0 0
      %458 = vmatprep.subr.bf16.mxu0 0
      %459 = vmatpush2.bf16.msra.mxu0 0
      %460 = vmatprep.subr.bf16.mxu0 0
      %461 = vmatpush2.bf16.msra.mxu0 0
      %462 = vmatprep.subr.bf16.mxu0 0
      %463 = vmatpush2.bf16.msra.mxu0 0
      %464 = vmatprep.subr.bf16.mxu0 0
      %465 = vmatpush2.bf16.msra.mxu0 0
      %466 = vmatprep.subr.bf16.mxu0 0
      %467 = vmatpush2.bf16.msra.mxu0 0
      %468 = vmatprep.subr.bf16.mxu0 0
      %469 = vmatpush2.bf16.msra.mxu0 0
      %470 = vmatprep.subr.bf16.mxu0 0
      %471 = vmatpush2.bf16.msra.mxu0 0
      %472 = vmatprep.mubr.bf16.mxu0 0
      %473 = vmatmul.mubr.bf16.gmra.mxu0 %v435
      %v474 = vpop.f32.mrf.mxu0
      %v475 = vadd.f32 %v404, %v474
      %v476 = vpop.f32.mrf.mxu0
      %v477 = vpop.f32.mrf.mxu0
      %v478 = vadd.f32 %v407, %v477
      %v479 = vpop.f32.mrf.mxu0
      %480 = vmatprep.mubr.bf16.mxu0 0
      %481 = vmatmul.mubr.bf16.gmra.mxu0 %v438
      %v482 = vpop.f32.mrf.mxu0
      %v483 = vadd.f32 %v412, %v482
      %v484 = vpop.f32.mrf.mxu0
      %v485 = vpop.f32.mrf.mxu0
      %v486 = vadd.f32 %v415, %v485
      %v487 = vpop.f32.mrf.mxu0
      %488 = vdwg.mxu0
      %489 = vst.msk [vmem:[%s309] sm:$0xff] %vm362, %v475
      %490 = vst.msk [vmem:[%s309 + $0x8] sm:$0xff] %vm362, %v478
      %491 = vst.msk [vmem:[%s309 + $0x10] sm:$0xff] %vm362, %v483
      %492 = vst.msk [vmem:[%s309 + $0x18] sm:$0xff] %vm362, %v486
      %v493 = vsel %vm362, %v475, 0.0
      %v494 = vsel %vm362, %v478, 0.0
      %v495 = vadd.f32 %v493, %v494
      %v496 = vsel %vm362, %v483, 0.0
      %v497 = vadd.f32 %v495, %v496
      %v498 = vsel %vm362, %v486, 0.0
      %v499 = vadd.f32 %v497, %v498
      %v500 = vrot.slane %v499, 4
      %v501 = vadd.f32 %v499, %v500
      %v502 = vrot.slane %v501, 2
      %v503 = vadd.f32 %v501, %v502
      %v504 = vrot.slane %v503, 1
      %v505 = vadd.f32 %v503, %v504
      %v506 = vmul.f32 %v475, %v475
      %v507 = vmul.f32 %v478, %v478
      %v508 = vmul.f32 %v483, %v483
      %v509 = vmul.f32 %v486, %v486
      %v510 = vsel %vm362, %v506, 0.0
      %v511 = vsel %vm362, %v507, 0.0
      %v512 = vadd.f32 %v510, %v511
      %v513 = vsel %vm362, %v508, 0.0
      %v514 = vadd.f32 %v512, %v513
      %v515 = vsel %vm362, %v509, 0.0
      %v516 = vadd.f32 %v514, %v515
      %v517 = vrot.slane %v516, 4
      %v518 = vadd.f32 %v516, %v517
      %v519 = vrot.slane %v518, 2
      %v520 = vadd.f32 %v518, %v519
      %v521 = vrot.slane %v520, 1
      %v522 = vadd.f32 %v520, %v521
      %vm523 = vcmask 1040384
      %v524 = vsel %vm523, %v505, %v522
      %vm525 = vcmask 123904
      %526 = vst.msk [vmem:[%s314] sm:$0x3] %vm525, %v524
      %s527 = smul.u32 4, %s19
      %p528 = scmp.lt.s32.totalorder %s527, 15
      %s529 = scalar_select %p528, %s527, 15
      %s530 = smul.addr %s529, 8
      %s531 = scalar_lea.vmem %s6, %s530
      %p532 = scmp.lt.s32.totalorder %s19, 3
      %s533 = scalar_select %p532, %s19, 3
      %s534 = smul.addr %s533, 2
      %s535 = scalar_lea.vmem %s7, %s534
      // Predicated region
      $region45: #{ghost_mlp_forward.6} parent=43 // pred_check
        %p536 = pneg %p173
      $region46: #{ghost_mlp_forward.6} parent=43 // pred_check_branch
        %538 = sbr.rel (%p536) target = $region48
      $region47: #{ghost_mlp_forward.6} parent=43 // pred_region
        %s539 = smul.u32 4, %s19
      $region48: #{ghost_mlp_forward.6} parent=43 // pred_fallthru
        _
      // Predicated region
      $region49: #{ghost_mlp_forward.6} parent=43 // pred_check
        %p540 = pneg %p199
      $region50: #{ghost_mlp_forward.6} parent=43 // pred_check_branch
        %542 = sbr.rel (%p540) target = $region52
      $region51: #{ghost_mlp_forward.6} parent=43 // pred_region
        _
      $region52: #{ghost_mlp_forward.6} parent=43 // pred_fallthru
        _
    $region44: #{ghost_mlp_forward.6} parent=5 // pred_fallthru
      _
    %p543 = scmp.le.s32.totalorder 2, %s14
    // Predicated region
    $region53: #{ghost_mlp_forward.6} parent=5 // pred_check
      %p544 = pneg %p543
    $region54: #{ghost_mlp_forward.6} parent=5 // pred_check_branch
      %546 = sbr.rel (%p544) target = $region56
    $region55: #{ghost_mlp_forward.6} parent=5 // pred_region
      %s547 = ssub.s32 %s14, 2
      // Predicated region
      $region57: #{ghost_mlp_forward.6} parent=55 // pred_check
        %p548 = pneg %p179
      $region58: #{ghost_mlp_forward.6} parent=55 // pred_check_branch
        %550 = sbr.rel (%p548) target = $region60
      $region59: #{ghost_mlp_forward.6} parent=55 // pred_region
        %s551 = smul.u32 4, %s20
        %p552 = scmp.lt.s32.totalorder %s551, 15
        %s553 = scalar_select %p552, %s551, 15
        %s554 = smul.addr %s553, 8
        %s555 = scalar_lea.vmem %s6, %s554
      $region60: #{ghost_mlp_forward.6} parent=55 // pred_fallthru
        _
      // Predicated region
      $region61: #{ghost_mlp_forward.6} parent=55 // pred_check
        %p556 = pneg %p205
      $region62: #{ghost_mlp_forward.6} parent=55 // pred_check_branch
        %558 = sbr.rel (%p556) target = $region64
      $region63: #{ghost_mlp_forward.6} parent=55 // pred_region
        %p559 = scmp.lt.s32.totalorder %s20, 3
        %s560 = scalar_select %p559, %s20, 3
        %s561 = smul.addr %s560, 2
        %s562 = scalar_lea.vmem %s7, %s561
      $region64: #{ghost_mlp_forward.6} parent=55 // pred_fallthru
        _
    $region56: #{ghost_mlp_forward.6} parent=5 // pred_fallthru
      _
  $region6: #{ghost_mlp_forward.6} parent=0 // loop_footer
    %s18 = sadd.s32 1, %s14
  $region7: #{ghost_mlp_forward.6} parent=0 // loop_footer_branch
    %13 = sbr.rel target = $region3
  $region8: #{ghost_mlp_forward.6} parent=0 // loop_exit
    _

// kernel: ghost_mlp_forward.4
$region0: #{ghost_mlp_forward.4}
  #allocation0 [shape = 'u32[]', space=smem, size = 0x4, offset = 0x4, fixed_abs, tag = 'smem constant byte address 0x4 - core index']
  #allocation1 [shape = 'u32[144,128]{1,0:T(1,128)}', space=vmem, size = 0x12000, scoped, tag = 'internal scratch']
  %s0 = inlined_call_operand.vmem [shape: f32[128,16], index: 0, kind: input, shape index: {}]
  %s1 = inlined_call_operand.vmem [shape: bf16[16,16], index: 1, kind: input, shape index: {}]
  %s2 = inlined_call_operand.vmem [shape: f32[128,16], index: 2, kind: output, shape index: {0}]
  %s3 = inlined_call_operand.vmem [shape: f32[4,2,16], index: 3, kind: output, shape index: {1}]
  %4 = xla_tuple %s2, %s3
  %s5 = sld [smem:[#allocation0]]
  $region49: #{ghost_mlp_forward.4} parent=0
    _
  %s7 = ssub.s32 1, %s5
  %s8 = scalar_select 0, %s7, %s5
  loop: start=0, step=1, limit=6
  $region2: #{ghost_mlp_forward.4} parent=0 // loop_pre_header
    _
  $region3: #{ghost_mlp_forward.4} parent=0 // loop_header
    %s10 = sphi 0, %s14
    %p11 = scmp.ge.s32.totalorder %s10, 6
    %s20 = sphi 0, %s22
    %s23 = sphi 0, %s20
    %s24 = sphi 0, %s23
    %s40 = sphi 0, %s24
    %s44 = sphi 0, %s44
    %s46 = sphi 0, %s44
    %s47 = sphi 0, %s46
    %s61 = sphi 0, %s47
    %s67 = sphi 0, %s69
    %s70 = sphi 0, %s67
    %s71 = sphi 0, %s70
    %s87 = sphi 0, %s71
    %s93 = sphi 0, %s95
    %s96 = sphi 0, %s93
    %s97 = sphi 0, %s96
    %s113 = sphi 0, %s97
  $region4: #{ghost_mlp_forward.4} parent=0 // loop_header_branch
    %13 = sbr.rel (%p11) target = $region8
  $region5: #{ghost_mlp_forward.4} parent=0 // loop_body
    %s15 = ssub.s32 %s10, 1
    %s16 = ssub.s32 %s10, 2
    %s17 = sadd.s32 %s10, 1
    %s18 = ssub.s32 %s10, %s17
    %p19 = scmp.eq.s32.totalorder %s18, 0
    %s21 = sadd.s32 %s20, 1
    %s22 = scalar_select %p19, %s20, %s21
    %p25 = pneg %p19
    %p26 = scmp.eq.s32.totalorder %s10, 3
    %p27 = por %p25, %p26
    %p28 = scmp.ne.s32.totalorder %s20, %s23
    %p29 = scmp.eq.s32.totalorder %s10, 0
    %p30 = por %p28, %p29
    %p31 = scmp.ne.s32.totalorder %s20, %s23
    %p32 = scmp.eq.s32.totalorder %s15, 3
    %p33 = por %p31, %p32
    %p34 = scmp.ne.s32.totalorder %s23, %s24
    %p35 = scmp.eq.s32.totalorder %s15, 0
    %p36 = por %p34, %p35
    %p37 = scmp.ne.s32.totalorder %s23, %s24
    %p38 = scmp.eq.s32.totalorder %s16, 3
    %p39 = por %p37, %p38
    %p41 = scmp.ne.s32.totalorder %s24, %s40
    %p42 = scmp.eq.s32.totalorder %s16, 0
    %p43 = por %p41, %p42
    %s45 = sadd.s32 %s44, 1
    %p48 = scmp.eq.s32.totalorder %s10, 3
    %p49 = scmp.ne.s32.totalorder %s44, %s46
    %p50 = scmp.eq.s32.totalorder %s10, 0
    %p51 = por %p49, %p50
    %p52 = scmp.ne.s32.totalorder %s44, %s46
    %p53 = scmp.eq.s32.totalorder %s15, 3
    %p54 = por %p52, %p53
    %p55 = scmp.ne.s32.totalorder %s46, %s47
    %p56 = scmp.eq.s32.totalorder %s15, 0
    %p57 = por %p55, %p56
    %p58 = scmp.ne.s32.totalorder %s46, %s47
    %p59 = scmp.eq.s32.totalorder %s16, 3
    %p60 = por %p58, %p59
    %p62 = scmp.ne.s32.totalorder %s47, %s61
    %p63 = scmp.eq.s32.totalorder %s16, 0
    %p64 = por %p62, %p63
    %s65 = ssub.s32 %s10, %s17
    %p66 = scmp.eq.s32.totalorder %s65, 0
    %s68 = sadd.s32 %s67, 1
    %s69 = scalar_select %p66, %s67, %s68
    %p72 = pneg %p66
    %p73 = scmp.eq.s32.totalorder %s10, 3
    %p74 = por %p72, %p73
    %p75 = scmp.ne.s32.totalorder %s67, %s70
    %p76 = scmp.eq.s32.totalorder %s10, 0
    %p77 = por %p75, %p76
    %p78 = scmp.ne.s32.totalorder %s67, %s70
    %p79 = scmp.eq.s32.totalorder %s15, 3
    %p80 = por %p78, %p79
    %p81 = scmp.ne.s32.totalorder %s70, %s71
    %p82 = scmp.eq.s32.totalorder %s15, 0
    %p83 = por %p81, %p82
    %p84 = scmp.ne.s32.totalorder %s70, %s71
    %p85 = scmp.eq.s32.totalorder %s16, 3
    %p86 = por %p84, %p85
    %p88 = scmp.ne.s32.totalorder %s71, %s87
    %p89 = scmp.eq.s32.totalorder %s16, 0
    %p90 = por %p88, %p89
    %s91 = ssub.s32 %s10, %s17
    %p92 = scmp.eq.s32.totalorder %s91, 0
    %s94 = sadd.s32 %s93, 1
    %s95 = scalar_select %p92, %s93, %s94
    %p98 = pneg %p92
    %p99 = scmp.eq.s32.totalorder %s10, 3
    %p100 = por %p98, %p99
    %p101 = scmp.ne.s32.totalorder %s93, %s96
    %p102 = scmp.eq.s32.totalorder %s10, 0
    %p103 = por %p101, %p102
    %p104 = scmp.ne.s32.totalorder %s93, %s96
    %p105 = scmp.eq.s32.totalorder %s15, 3
    %p106 = por %p104, %p105
    %p107 = scmp.ne.s32.totalorder %s96, %s97
    %p108 = scmp.eq.s32.totalorder %s15, 0
    %p109 = por %p107, %p108
    %p110 = scmp.ne.s32.totalorder %s96, %s97
    %p111 = scmp.eq.s32.totalorder %s16, 3
    %p112 = por %p110, %p111
    %p114 = scmp.ne.s32.totalorder %s97, %s113
    %p115 = scmp.eq.s32.totalorder %s16, 0
    %p116 = por %p114, %p115
    %p117 = scmp.le.s32.totalorder 1, %s10
    %p118 = scmp.lt.s32.totalorder %s10, 5
    %p119 = pnand %p117, %p118
    %p120 = pneg %p119
    // Predicated region
    $region9: #{ghost_mlp_forward.4} parent=5 // pred_check
      _
    $region10: #{ghost_mlp_forward.4} parent=5 // pred_check_branch
      %122 = sbr.rel (%p119) target = $region12
    $region11: #{ghost_mlp_forward.4} parent=5 // pred_region
      %s123 = ssub.s32 %s10, 1
      // Predicated region
      $region13: #{ghost_mlp_forward.4} parent=11 // pred_check
        %p124 = pneg %p57
      $region14: #{ghost_mlp_forward.4} parent=11 // pred_check_branch
        %126 = sbr.rel (%p124) target = $region16
      $region15: #{ghost_mlp_forward.4} parent=11 // pred_region
        _
      $region16: #{ghost_mlp_forward.4} parent=11 // pred_fallthru
        _
    $region12: #{ghost_mlp_forward.4} parent=5 // pred_fallthru
      _
    %p127 = scmp.lt.s32.totalorder %s10, 4
    // Predicated region
    $region17: #{ghost_mlp_forward.4} parent=5 // pred_check
      %p128 = pneg %p127
    $region18: #{ghost_mlp_forward.4} parent=5 // pred_check_branch
      %130 = sbr.rel (%p128) target = $region20
    $region19: #{ghost_mlp_forward.4} parent=5 // pred_region
      // Predicated region
      $region21: #{ghost_mlp_forward.4} parent=19 // pred_check
        %p131 = pneg %p30
      $region22: #{ghost_mlp_forward.4} parent=19 // pred_check_branch
        %133 = sbr.rel (%p131) target = $region24
      $region23: #{ghost_mlp_forward.4} parent=19 // pred_region
        %s134 = smul.u32 4, %s10
        %p135 = scmp.lt.s32.totalorder %s134, 15
        %s136 = scalar_select %p135, %s134, 15
        %s137 = smul.addr %s136, 8
        %s138 = scalar_lea.vmem %s0, %s137
        %s139 = smul.u32 4, %s10
      $region24: #{ghost_mlp_forward.4} parent=19 // pred_fallthru
        _
    $region20: #{ghost_mlp_forward.4} parent=5 // pred_fallthru
      _
    %p140 = scmp.le.s32.totalorder 1, %s10
    %p141 = scmp.lt.s32.totalorder %s10, 5
    %p142 = pnand %p140, %p141
    %p143 = pneg %p142
    // Predicated region
    $region25: #{ghost_mlp_forward.4} parent=5 // pred_check
      _
    $region26: #{ghost_mlp_forward.4} parent=5 // pred_check_branch
      %145 = sbr.rel (%p142) target = $region28
    $region27: #{ghost_mlp_forward.4} parent=5 // pred_region
      %s146 = ssub.s32 %s10, 1
      %s147 = smul.u32 4, %s15
      %p148 = scmp.lt.s32.totalorder %s147, 15
      %s149 = scalar_select %p148, %s147, 15
      %s150 = smul.addr %s149, 8
      %s151 = scalar_lea.vmem %s0, %s150
      %p152 = pneg %p36
      %p153 = pneg %p33
      %p154 = pneg %p57
      %p155 = pneg %p54
      %p156 = pneg %p83
      %p157 = pneg %p80
      %s158 = smul.u32 4, %s15
      %p159 = scmp.lt.s32.totalorder %s158, 15
      %s160 = scalar_select %p159, %s158, 15
      %s161 = smul.addr %s160, 8
      %s162 = scalar_lea.vmem %s2, %s161
      %p163 = pneg %p109
      %p164 = pneg %p106
      %p165 = scmp.lt.s32.totalorder %s15, 3
      %s166 = scalar_select %p165, %s15, 3
      %s167 = smul.addr %s166, 2
      %s168 = scalar_lea.vmem %s3, %s167
      %s169 = smul.u32 4, %s15
      %p170 = scmp.lt.s32.totalorder %s169, 15
      %s171 = scalar_select %p170, %s169, 15
      %s172 = smul.addr %s171, 8
      %s173 = scalar_lea.vmem %s0, %s172
      %s174 = smul.u32 4, %s15
      %s175 = smul.u32 4, %s15
      %p176 = scmp.lt.s32.totalorder %s175, 15
      %s177 = scalar_select %p176, %s175, 15
      %s178 = smul.addr %s177, 8
      %s179 = scalar_lea.vmem %s2, %s178
      %s180 = smul.u32 4, %s15
      %p181 = scmp.lt.s32.totalorder %s15, 3
      %s182 = scalar_select %p181, %s15, 3
      %s183 = smul.addr %s182, 2
      %s184 = scalar_lea.vmem %s3, %s183
      %v186 = vld [vmem:[%s173] sm:$0xff]
      %v187 = vld [vmem:[%s173 + $0x8] sm:$0xff]
      %v188 = vld [vmem:[%s173 + $0x10] sm:$0xff]
      %v189 = vld [vmem:[%s173 + $0x18] sm:$0xff]
      %v190 = vpack.c.bf16 %v187, %v186
      %v191 = vpack.c.bf16 %v189, %v188
      %v192 = vld [vmem:[%s1] sm:$0xf]
      %v193 = vld [vmem:[%s1 + $0x4] sm:$0xf]
      %v196 = vunpack.c.l.b16 %v192
      %v197 = vunpack.c.l.b16 %v193
      %v198 = vpack.c.b16 %v197, %v196
      %vm200 = vcmask 130048
      %v202 = vsel %vm200, %v190, 0
      %v205 = vsel %vm200, %v191, 0
      %207 = vmatprep.subr.bf16.mxu0 0
      %208 = vmatpush1.bf16.msra.mxu0 0
      %209 = vmatprep.subr.bf16.mxu0 0
      %210 = vmatpush1.bf16.msra.mxu0 0
      %211 = vmatprep.subr.bf16.mxu0 0
      %212 = vmatpush1.bf16.msra.mxu0 0
      %213 = vmatprep.subr.bf16.mxu0 0
      %214 = vmatpush1.bf16.msra.mxu0 0
      %215 = vmatprep.subr.bf16.mxu0 0
      %216 = vmatpush1.bf16.msra.mxu0 0
      %217 = vmatprep.subr.bf16.mxu0 0
      %218 = vmatpush1.bf16.msra.mxu0 0
      %219 = vmatprep.subr.bf16.mxu0 0
      %220 = vmatpush1.bf16.msra.mxu0 0
      %221 = vmatprep.subr.bf16.mxu0 0
      %222 = vmatpush1.bf16.msra.mxu0 %v198
      %223 = vmatprep.subr.bf16.mxu0 0
      %224 = vmatpush2.bf16.msra.mxu0 0
      %225 = vmatprep.subr.bf16.mxu0 0
      %226 = vmatpush2.bf16.msra.mxu0 0
      %227 = vmatprep.subr.bf16.mxu0 0
      %228 = vmatpush2.bf16.msra.mxu0 0
      %229 = vmatprep.subr.bf16.mxu0 0
      %230 = vmatpush2.bf16.msra.mxu0 0
      %231 = vmatprep.subr.bf16.mxu0 0
      %232 = vmatpush2.bf16.msra.mxu0 0
      %233 = vmatprep.subr.bf16.mxu0 0
      %234 = vmatpush2.bf16.msra.mxu0 0
      %235 = vmatprep.subr.bf16.mxu0 0
      %236 = vmatpush2.bf16.msra.mxu0 0
      %237 = vmatprep.subr.bf16.mxu0 0
      %238 = vmatpush2.bf16.msra.mxu0 0
      %239 = vmatprep.mubr.bf16.mxu0 0
      %240 = vmatmul.mubr.bf16.gmra.mxu0 %v202
      %v241 = vpop.f32.mrf.mxu0
      %v242 = vadd.f32 0.0, %v241
      %v243 = vpop.f32.mrf.mxu0
      %v244 = vpop.f32.mrf.mxu0
      %v245 = vadd.f32 0.0, %v244
      %v246 = vpop.f32.mrf.mxu0
      %247 = vmatprep.mubr.bf16.mxu0 0
      %248 = vmatmul.mubr.bf16.gmra.mxu0 %v205
      %v249 = vpop.f32.mrf.mxu0
      %v250 = vadd.f32 0.0, %v249
      %v251 = vpop.f32.mrf.mxu0
      %v252 = vpop.f32.mrf.mxu0
      %v253 = vadd.f32 0.0, %v252
      %v254 = vpop.f32.mrf.mxu0
      %255 = vdwg.mxu0
      %256 = vst.msk [vmem:[%s179] sm:$0xff] %vm200, %v242
      %257 = vst.msk [vmem:[%s179 + $0x8] sm:$0xff] %vm200, %v245
      %258 = vst.msk [vmem:[%s179 + $0x10] sm:$0xff] %vm200, %v250
      %259 = vst.msk [vmem:[%s179 + $0x18] sm:$0xff] %vm200, %v253
      %v260 = vsel %vm200, %v242, 0.0
      %v261 = vsel %vm200, %v245, 0.0
      %v262 = vadd.f32 %v260, %v261
      %v263 = vsel %vm200, %v250, 0.0
      %v264 = vadd.f32 %v262, %v263
      %v265 = vsel %vm200, %v253, 0.0
      %v266 = vadd.f32 %v264, %v265
      %v267 = vrot.slane %v266, 4
      %v268 = vadd.f32 %v266, %v267
      %v269 = vrot.slane %v268, 2
      %v270 = vadd.f32 %v268, %v269
      %v271 = vrot.slane %v270, 1
      %v272 = vadd.f32 %v270, %v271
      %v273 = vmul.f32 %v242, %v242
      %v274 = vmul.f32 %v245, %v245
      %v275 = vmul.f32 %v250, %v250
      %v276 = vmul.f32 %v253, %v253
      %v277 = vsel %vm200, %v273, 0.0
      %v278 = vsel %vm200, %v274, 0.0
      %v279 = vadd.f32 %v277, %v278
      %v280 = vsel %vm200, %v275, 0.0
      %v281 = vadd.f32 %v279, %v280
      %v282 = vsel %vm200, %v276, 0.0
      %v283 = vadd.f32 %v281, %v282
      %v284 = vrot.slane %v283, 4
      %v285 = vadd.f32 %v283, %v284
      %v286 = vrot.slane %v285, 2
      %v287 = vadd.f32 %v285, %v286
      %v288 = vrot.slane %v287, 1
      %v289 = vadd.f32 %v287, %v288
      %vm290 = vcmask 1040384
      %v291 = vsel %vm290, %v272, %v289
      %vm292 = vcmask 123904
      %293 = vst.msk [vmem:[%s184] sm:$0x3] %vm292, %v291
      %s294 = smul.u32 4, %s15
      %p295 = scmp.lt.s32.totalorder %s294, 15
      %s296 = scalar_select %p295, %s294, 15
      %s297 = smul.addr %s296, 8
      %s298 = scalar_lea.vmem %s2, %s297
      %p299 = scmp.lt.s32.totalorder %s15, 3
      %s300 = scalar_select %p299, %s15, 3
      %s301 = smul.addr %s300, 2
      %s302 = scalar_lea.vmem %s3, %s301
      // Predicated region
      $region29: #{ghost_mlp_forward.4} parent=27 // pred_check
        %p303 = pneg %p80
      $region30: #{ghost_mlp_forward.4} parent=27 // pred_check_branch
        %305 = sbr.rel (%p303) target = $region32
      $region31: #{ghost_mlp_forward.4} parent=27 // pred_region
        %s306 = smul.u32 4, %s15
      $region32: #{ghost_mlp_forward.4} parent=27 // pred_fallthru
        _
      // Predicated region
      $region33: #{ghost_mlp_forward.4} parent=27 // pred_check
        %p307 = pneg %p106
      $region34: #{ghost_mlp_forward.4} parent=27 // pred_check_branch
        %309 = sbr.rel (%p307) target = $region36
      $region35: #{ghost_mlp_forward.4} parent=27 // pred_region
        _
      $region36: #{ghost_mlp_forward.4} parent=27 // pred_fallthru
        _
    $region28: #{ghost_mlp_forward.4} parent=5 // pred_fallthru
      _
    %p310 = scmp.le.s32.totalorder 2, %s10
    // Predicated region
    $region37: #{ghost_mlp_forward.4} parent=5 // pred_check
      %p311 = pneg %p310
    $region38: #{ghost_mlp_forward.4} parent=5 // pred_check_branch
      %313 = sbr.rel (%p311) target = $region40
    $region39: #{ghost_mlp_forward.4} parent=5 // pred_region
      %s314 = ssub.s32 %s10, 2
      // Predicated region
      $region41: #{ghost_mlp_forward.4} parent=39 // pred_check
        %p315 = pneg %p86
      $region42: #{ghost_mlp_forward.4} parent=39 // pred_check_branch
        %317 = sbr.rel (%p315) target = $region44
      $region43: #{ghost_mlp_forward.4} parent=39 // pred_region
        %s318 = smul.u32 4, %s16
        %p319 = scmp.lt.s32.totalorder %s318, 15
        %s320 = scalar_select %p319, %s318, 15
        %s321 = smul.addr %s320, 8
        %s322 = scalar_lea.vmem %s2, %s321
      $region44: #{ghost_mlp_forward.4} parent=39 // pred_fallthru
        _
      // Predicated region
      $region45: #{ghost_mlp_forward.4} parent=39 // pred_check
        %p323 = pneg %p112
      $region46: #{ghost_mlp_forward.4} parent=39 // pred_check_branch
        %325 = sbr.rel (%p323) target = $region48
      $region47: #{ghost_mlp_forward.4} parent=39 // pred_region
        %p326 = scmp.lt.s32.totalorder %s16, 3
        %s327 = scalar_select %p326, %s16, 3
        %s328 = smul.addr %s327, 2
        %s329 = scalar_lea.vmem %s3, %s328
      $region48: #{ghost_mlp_forward.4} parent=39 // pred_fallthru
        _
    $region40: #{ghost_mlp_forward.4} parent=5 // pred_fallthru
      _
  $region6: #{ghost_mlp_forward.4} parent=0 // loop_footer
    %s14 = sadd.s32 1, %s10
  $region7: #{ghost_mlp_forward.4} parent=0 // loop_footer_branch
    %9 = sbr.rel target = $region3
  $region8: #{ghost_mlp_forward.4} parent=0 // loop_exit
    _

// kernel: ghost_mlp_forward.5
$region0: #{ghost_mlp_forward.5}
  #allocation0 [shape = 'u32[]', space=smem, size = 0x4, offset = 0x4, fixed_abs, tag = 'smem constant byte address 0x4 - core index']
  #allocation1 [shape = 'u32[144,128]{1,0:T(1,128)}', space=vmem, size = 0x12000, scoped, tag = 'internal scratch']
  #allocation2 [shape = 'f32[96,16]{1,0:T(8,128)}', space=vmem, size = 0xc000, scoped, tag = 'scratch operand']
  %s0 = inlined_call_operand.vmem [shape: f32[2,64,16], index: 0, kind: input, shape index: {}]
  %s1 = inlined_call_operand.vmem [shape: f32[9,16], index: 1, kind: input, shape index: {}]
  %s2 = inlined_call_operand.vmem [shape: f32[1,16], index: 2, kind: input, shape index: {}]
  %s3 = inlined_call_operand.vmem [shape: f32[1,16], index: 3, kind: input, shape index: {}]
  %s4 = inlined_call_operand.vmem [shape: bf16[2,64,16], index: 4, kind: output, shape index: {0}]
  %s5 = inlined_call_operand.vmem [shape: f32[2,64,16], index: 5, kind: output, shape index: {1}]
  %s6 = inlined_call_operand.vmem [shape: f32[2,2,16], index: 6, kind: output, shape index: {2}]
  %7 = xla_tuple %s4, %s5, %s6
  %s8 = sld [smem:[#allocation0]]
  $region65: #{ghost_mlp_forward.5} parent=0
    _
  %s10 = ssub.s32 1, %s8
  %s11 = scalar_select 0, %s10, %s8
  loop: start=0, step=1, limit=4
  $region2: #{ghost_mlp_forward.5} parent=0 // loop_pre_header
    _
  $region3: #{ghost_mlp_forward.5} parent=0 // loop_header
    %s13 = sphi 0, %s17
    %p14 = scmp.ge.s32.totalorder %s13, 4
    %s23 = sphi 0, %s25
    %s26 = sphi 0, %s23
    %s27 = sphi 0, %s26
    %s43 = sphi 0, %s27
    %s47 = sphi 0, %s47
    %s49 = sphi 0, %s47
    %s50 = sphi 0, %s49
    %s64 = sphi 0, %s50
    %s68 = sphi 0, %s68
    %s70 = sphi 0, %s68
    %s71 = sphi 0, %s70
    %s85 = sphi 0, %s71
    %s89 = sphi 0, %s89
    %s91 = sphi 0, %s89
    %s92 = sphi 0, %s91
    %s106 = sphi 0, %s92
    %s112 = sphi 0, %s114
    %s115 = sphi 0, %s112
    %s116 = sphi 0, %s115
    %s132 = sphi 0, %s116
    %s138 = sphi 0, %s140
    %s141 = sphi 0, %s138
    %s142 = sphi 0, %s141
    %s158 = sphi 0, %s142
    %s164 = sphi 0, %s166
    %s167 = sphi 0, %s164
    %s168 = sphi 0, %s167
    %s184 = sphi 0, %s168
  $region4: #{ghost_mlp_forward.5} parent=0 // loop_header_branch
    %16 = sbr.rel (%p14) target = $region8
  $region5: #{ghost_mlp_forward.5} parent=0 // loop_body
    %s18 = ssub.s32 %s13, 1
    %s19 = ssub.s32 %s13, 2
    %s20 = sadd.s32 %s13, 1
    %s21 = ssub.s32 %s13, %s20
    %p22 = scmp.eq.s32.totalorder %s21, 0
    %s24 = sadd.s32 %s23, 1
    %s25 = scalar_select %p22, %s23, %s24
    %p28 = pneg %p22
    %p29 = scmp.eq.s32.totalorder %s13, 1
    %p30 = por %p28, %p29
    %p31 = scmp.ne.s32.totalorder %s23, %s26
    %p32 = scmp.eq.s32.totalorder %s13, 0
    %p33 = por %p31, %p32
    %p34 = scmp.ne.s32.totalorder %s23, %s26
    %p35 = scmp.eq.s32.totalorder %s18, 1
    %p36 = por %p34, %p35
    %p37 = scmp.ne.s32.totalorder %s26, %s27
    %p38 = scmp.eq.s32.totalorder %s18, 0
    %p39 = por %p37, %p38
    %p40 = scmp.ne.s32.totalorder %s26, %s27
    %p41 = scmp.eq.s32.totalorder %s19, 1
    %p42 = por %p40, %p41
    %p44 = scmp.ne.s32.totalorder %s27, %s43
    %p45 = scmp.eq.s32.totalorder %s19, 0
    %p46 = por %p44, %p45
    %s48 = sadd.s32 %s47, 1
    %p51 = scmp.eq.s32.totalorder %s13, 1
    %p52 = scmp.ne.s32.totalorder %s47, %s49
    %p53 = scmp.eq.s32.totalorder %s13, 0
    %p54 = por %p52, %p53
    %p55 = scmp.ne.s32.totalorder %s47, %s49
    %p56 = scmp.eq.s32.totalorder %s18, 1
    %p57 = por %p55, %p56
    %p58 = scmp.ne.s32.totalorder %s49, %s50
    %p59 = scmp.eq.s32.totalorder %s18, 0
    %p60 = por %p58, %p59
    %p61 = scmp.ne.s32.totalorder %s49, %s50
    %p62 = scmp.eq.s32.totalorder %s19, 1
    %p63 = por %p61, %p62
    %p65 = scmp.ne.s32.totalorder %s50, %s64
    %p66 = scmp.eq.s32.totalorder %s19, 0
    %p67 = por %p65, %p66
    %s69 = sadd.s32 %s68, 1
    %p72 = scmp.eq.s32.totalorder %s13, 1
    %p73 = scmp.ne.s32.totalorder %s68, %s70
    %p74 = scmp.eq.s32.totalorder %s13, 0
    %p75 = por %p73, %p74
    %p76 = scmp.ne.s32.totalorder %s68, %s70
    %p77 = scmp.eq.s32.totalorder %s18, 1
    %p78 = por %p76, %p77
    %p79 = scmp.ne.s32.totalorder %s70, %s71
    %p80 = scmp.eq.s32.totalorder %s18, 0
    %p81 = por %p79, %p80
    %p82 = scmp.ne.s32.totalorder %s70, %s71
    %p83 = scmp.eq.s32.totalorder %s19, 1
    %p84 = por %p82, %p83
    %p86 = scmp.ne.s32.totalorder %s71, %s85
    %p87 = scmp.eq.s32.totalorder %s19, 0
    %p88 = por %p86, %p87
    %s90 = sadd.s32 %s89, 1
    %p93 = scmp.eq.s32.totalorder %s13, 1
    %p94 = scmp.ne.s32.totalorder %s89, %s91
    %p95 = scmp.eq.s32.totalorder %s13, 0
    %p96 = por %p94, %p95
    %p97 = scmp.ne.s32.totalorder %s89, %s91
    %p98 = scmp.eq.s32.totalorder %s18, 1
    %p99 = por %p97, %p98
    %p100 = scmp.ne.s32.totalorder %s91, %s92
    %p101 = scmp.eq.s32.totalorder %s18, 0
    %p102 = por %p100, %p101
    %p103 = scmp.ne.s32.totalorder %s91, %s92
    %p104 = scmp.eq.s32.totalorder %s19, 1
    %p105 = por %p103, %p104
    %p107 = scmp.ne.s32.totalorder %s92, %s106
    %p108 = scmp.eq.s32.totalorder %s19, 0
    %p109 = por %p107, %p108
    %s110 = ssub.s32 %s13, %s20
    %p111 = scmp.eq.s32.totalorder %s110, 0
    %s113 = sadd.s32 %s112, 1
    %s114 = scalar_select %p111, %s112, %s113
    %p117 = pneg %p111
    %p118 = scmp.eq.s32.totalorder %s13, 1
    %p119 = por %p117, %p118
    %p120 = scmp.ne.s32.totalorder %s112, %s115
    %p121 = scmp.eq.s32.totalorder %s13, 0
    %p122 = por %p120, %p121
    %p123 = scmp.ne.s32.totalorder %s112, %s115
    %p124 = scmp.eq.s32.totalorder %s18, 1
    %p125 = por %p123, %p124
    %p126 = scmp.ne.s32.totalorder %s115, %s116
    %p127 = scmp.eq.s32.totalorder %s18, 0
    %p128 = por %p126, %p127
    %p129 = scmp.ne.s32.totalorder %s115, %s116
    %p130 = scmp.eq.s32.totalorder %s19, 1
    %p131 = por %p129, %p130
    %p133 = scmp.ne.s32.totalorder %s116, %s132
    %p134 = scmp.eq.s32.totalorder %s19, 0
    %p135 = por %p133, %p134
    %s136 = ssub.s32 %s13, %s20
    %p137 = scmp.eq.s32.totalorder %s136, 0
    %s139 = sadd.s32 %s138, 1
    %s140 = scalar_select %p137, %s138, %s139
    %p143 = pneg %p137
    %p144 = scmp.eq.s32.totalorder %s13, 1
    %p145 = por %p143, %p144
    %p146 = scmp.ne.s32.totalorder %s138, %s141
    %p147 = scmp.eq.s32.totalorder %s13, 0
    %p148 = por %p146, %p147
    %p149 = scmp.ne.s32.totalorder %s138, %s141
    %p150 = scmp.eq.s32.totalorder %s18, 1
    %p151 = por %p149, %p150
    %p152 = scmp.ne.s32.totalorder %s141, %s142
    %p153 = scmp.eq.s32.totalorder %s18, 0
    %p154 = por %p152, %p153
    %p155 = scmp.ne.s32.totalorder %s141, %s142
    %p156 = scmp.eq.s32.totalorder %s19, 1
    %p157 = por %p155, %p156
    %p159 = scmp.ne.s32.totalorder %s142, %s158
    %p160 = scmp.eq.s32.totalorder %s19, 0
    %p161 = por %p159, %p160
    %s162 = ssub.s32 %s13, %s20
    %p163 = scmp.eq.s32.totalorder %s162, 0
    %s165 = sadd.s32 %s164, 1
    %s166 = scalar_select %p163, %s164, %s165
    %p169 = pneg %p163
    %p170 = scmp.eq.s32.totalorder %s13, 1
    %p171 = por %p169, %p170
    %p172 = scmp.ne.s32.totalorder %s164, %s167
    %p173 = scmp.eq.s32.totalorder %s13, 0
    %p174 = por %p172, %p173
    %p175 = scmp.ne.s32.totalorder %s164, %s167
    %p176 = scmp.eq.s32.totalorder %s18, 1
    %p177 = por %p175, %p176
    %p178 = scmp.ne.s32.totalorder %s167, %s168
    %p179 = scmp.eq.s32.totalorder %s18, 0
    %p180 = por %p178, %p179
    %p181 = scmp.ne.s32.totalorder %s167, %s168
    %p182 = scmp.eq.s32.totalorder %s19, 1
    %p183 = por %p181, %p182
    %p185 = scmp.ne.s32.totalorder %s168, %s184
    %p186 = scmp.eq.s32.totalorder %s19, 0
    %p187 = por %p185, %p186
    %p188 = scmp.le.s32.totalorder 1, %s13
    %p189 = scmp.lt.s32.totalorder %s13, 3
    %p190 = pnand %p188, %p189
    %p191 = pneg %p190
    // Predicated region
    $region9: #{ghost_mlp_forward.5} parent=5 // pred_check
      _
    $region10: #{ghost_mlp_forward.5} parent=5 // pred_check_branch
      %193 = sbr.rel (%p190) target = $region12
    $region11: #{ghost_mlp_forward.5} parent=5 // pred_region
      %s194 = ssub.s32 %s13, 1
      // Predicated region
      $region13: #{ghost_mlp_forward.5} parent=11 // pred_check
        %p195 = pneg %p60
      $region14: #{ghost_mlp_forward.5} parent=11 // pred_check_branch
        %197 = sbr.rel (%p195) target = $region16
      $region15: #{ghost_mlp_forward.5} parent=11 // pred_region
        _
      $region16: #{ghost_mlp_forward.5} parent=11 // pred_fallthru
        _
      // Predicated region
      $region17: #{ghost_mlp_forward.5} parent=11 // pred_check
        %p198 = pneg %p81
      $region18: #{ghost_mlp_forward.5} parent=11 // pred_check_branch
        %200 = sbr.rel (%p198) target = $region20
      $region19: #{ghost_mlp_forward.5} parent=11 // pred_region
        _
      $region20: #{ghost_mlp_forward.5} parent=11 // pred_fallthru
        _
      // Predicated region
      $region21: #{ghost_mlp_forward.5} parent=11 // pred_check
        %p201 = pneg %p102
      $region22: #{ghost_mlp_forward.5} parent=11 // pred_check_branch
        %203 = sbr.rel (%p201) target = $region24
      $region23: #{ghost_mlp_forward.5} parent=11 // pred_region
        _
      $region24: #{ghost_mlp_forward.5} parent=11 // pred_fallthru
        _
    $region12: #{ghost_mlp_forward.5} parent=5 // pred_fallthru
      _
    %p204 = scmp.lt.s32.totalorder %s13, 2
    // Predicated region
    $region25: #{ghost_mlp_forward.5} parent=5 // pred_check
      %p205 = pneg %p204
    $region26: #{ghost_mlp_forward.5} parent=5 // pred_check_branch
      %207 = sbr.rel (%p205) target = $region28
    $region27: #{ghost_mlp_forward.5} parent=5 // pred_region
      // Predicated region
      $region29: #{ghost_mlp_forward.5} parent=27 // pred_check
        %p208 = pneg %p33
      $region30: #{ghost_mlp_forward.5} parent=27 // pred_check_branch
        %210 = sbr.rel (%p208) target = $region32
      $region31: #{ghost_mlp_forward.5} parent=27 // pred_region
        %p211 = scmp.lt.s32.totalorder %s13, 1
        %s212 = scalar_select %p211, %s13, 1
        %s213 = smul.addr %s212, 8
        %s214 = smul.addr %s213, 8
        %s215 = scalar_lea.vmem %s0, %s214
      $region32: #{ghost_mlp_forward.5} parent=27 // pred_fallthru
        _
    $region28: #{ghost_mlp_forward.5} parent=5 // pred_fallthru
      _
    %p216 = scmp.le.s32.totalorder 1, %s13
    %p217 = scmp.lt.s32.totalorder %s13, 3
    %p218 = pnand %p216, %p217
    %p219 = pneg %p218
    // Predicated region
    $region33: #{ghost_mlp_forward.5} parent=5 // pred_check
      _
    $region34: #{ghost_mlp_forward.5} parent=5 // pred_check_branch
      %221 = sbr.rel (%p218) target = $region36
    $region35: #{ghost_mlp_forward.5} parent=5 // pred_region
      %s222 = ssub.s32 %s13, 1
      %p223 = scmp.lt.s32.totalorder %s18, 1
      %s224 = scalar_select %p223, %s18, 1
      %s225 = smul.addr %s224, 8
      %s226 = smul.addr %s225, 8
      %s227 = scalar_lea.vmem %s0, %s226
      %p228 = pneg %p39
      %p229 = pneg %p36
      %p230 = pneg %p60
      %p231 = pneg %p57
      %p232 = pneg %p81
      %p233 = pneg %p78
      %p234 = pneg %p102
      %p235 = pneg %p99
      %p236 = pneg %p128
      %p237 = pneg %p125
      %p238 = scmp.lt.s32.totalorder %s18, 1
      %s239 = scalar_select %p238, %s18, 1
      %s240 = smul.addr %s239, 8
      %s241 = smul.addr %s240, 4
      %s242 = scalar_lea.vmem %s4, %s241
      %p243 = pneg %p154
      %p244 = pneg %p151
      %p245 = scmp.lt.s32.totalorder %s18, 1
      %s246 = scalar_select %p245, %s18, 1
      %s247 = smul.addr %s246, 8
      %s248 = smul.addr %s247, 8
      %s249 = scalar_lea.vmem %s5, %s248
      %p250 = pneg %p180
      %p251 = pneg %p177
      %p252 = scmp.lt.s32.totalorder %s18, 1
      %s253 = scalar_select %p252, %s18, 1
      %s254 = smul.addr %s253, 2
      %s255 = scalar_lea.vmem %s6, %s254
      %p256 = scmp.lt.s32.totalorder %s18, 1
      %s257 = scalar_select %p256, %s18, 1
      %s258 = smul.addr %s257, 8
      %s259 = smul.addr %s258, 8
      %s260 = scalar_lea.vmem %s0, %s259
      %p261 = scmp.lt.s32.totalorder %s18, 1
      %s262 = scalar_select %p261, %s18, 1
      %s263 = smul.addr %s262, 8
      %s264 = smul.addr %s263, 4
      %s265 = scalar_lea.vmem %s4, %s264
      %p266 = scmp.lt.s32.totalorder %s18, 1
      %s267 = scalar_select %p266, %s18, 1
      %s268 = smul.addr %s267, 8
      %s269 = smul.addr %s268, 8
      %s270 = scalar_lea.vmem %s5, %s269
      %p271 = scmp.lt.s32.totalorder %s18, 1
      %s272 = scalar_select %p271, %s18, 1
      %s273 = smul.addr %s272, 2
      %s274 = scalar_lea.vmem %s6, %s273
      %v275 = vld [vmem:[%s260] sm:$0xff]
      %v276 = vld [vmem:[%s260 + $0x8] sm:$0xff]
      %v277 = vld [vmem:[%s260 + $0x10] sm:$0xff]
      %v278 = vld [vmem:[%s260 + $0x18] sm:$0xff]
      %v279 = vld [vmem:[%s260 + $0x20] sm:$0xff]
      %v280 = vld [vmem:[%s260 + $0x28] sm:$0xff]
      %v281 = vld [vmem:[%s260 + $0x30] sm:$0xff]
      %v282 = vld [vmem:[%s260 + $0x38] sm:$0xff]
      %v283 = vld [vmem:[%s2] sm:$0x1]
      %v285 = vlaneseq
      %v286 = vshrl.u32 %v285, 7
      %v287 = vsub.s32 0, %v286
      %v288 = vrot.slane %v283, %v287
      %v290 = vmul.f32 %v275, %v288
      %v291 = vmul.f32 %v276, %v288
      %v292 = vmul.f32 %v277, %v288
      %v293 = vmul.f32 %v278, %v288
      %v294 = vmul.f32 %v279, %v288
      %v295 = vmul.f32 %v280, %v288
      %v296 = vmul.f32 %v281, %v288
      %v297 = vmul.f32 %v282, %v288
      %v298 = vld [vmem:[%s3] sm:$0x1]
      %v300 = vlaneseq
      %v301 = vshrl.u32 %v300, 7
      %v302 = vsub.s32 0, %v301
      %v303 = vrot.slane %v298, %v302
      %v305 = vadd.f32 %v290, %v303
      %v306 = vadd.f32 %v291, %v303
      %v307 = vadd.f32 %v292, %v303
      %v308 = vadd.f32 %v293, %v303
      %v309 = vadd.f32 %v294, %v303
      %v310 = vadd.f32 %v295, %v303
      %v311 = vadd.f32 %v296, %v303
      %v312 = vadd.f32 %v297, %v303
      %v313 = vmax.f32 %v305, 0.0
      %v314 = vmax.f32 %v306, 0.0
      %v315 = vmax.f32 %v307, 0.0
      %v316 = vmax.f32 %v308, 0.0
      %v317 = vmax.f32 %v309, 0.0
      %v318 = vmax.f32 %v310, 0.0
      %v319 = vmax.f32 %v311, 0.0
      %v320 = vmax.f32 %v312, 0.0
      %v321 = vpack.c.bf16 %v314, %v313
      %v322 = vpack.c.bf16 %v316, %v315
      %v323 = vpack.c.bf16 %v318, %v317
      %v324 = vpack.c.bf16 %v320, %v319
      %v329 = vunpack.c.l.b16 %v321
      %v330 = vunpack.c.h.b16 %v321
      %v331 = vunpack.c.l.b16 %v322
      %v332 = vunpack.c.h.b16 %v322
      %v333 = vunpack.c.l.b16 %v323
      %v334 = vunpack.c.h.b16 %v323
      %v335 = vunpack.c.l.b16 %v324
      %v336 = vunpack.c.h.b16 %v324
      %v337 = vpack.c.b16 %v329, %v329
      %v338 = vpack.c.b16 %v330, %v330
      %v339 = vpack.c.b16 %v331, %v331
      %v340 = vpack.c.b16 %v332, %v332
      %v341 = vpack.c.b16 %v333, %v333
      %v342 = vpack.c.b16 %v334, %v334
      %v343 = vpack.c.b16 %v335, %v335
      %v344 = vpack.c.b16 %v336, %v336
      %vm353 = vcmask 125952
      %354 = vst.msk [vmem:[%s265] sm:$0xf] %vm353, %v337
      %355 = vst.msk [vmem:[%s265 + $0x4] sm:$0xf] %vm353, %v338
      %356 = vst.msk [vmem:[%s265 + $0x8] sm:$0xf] %vm353, %v339
      %357 = vst.msk [vmem:[%s265 + $0xc] sm:$0xf] %vm353, %v340
      %358 = vst.msk [vmem:[%s265 + $0x10] sm:$0xf] %vm353, %v341
      %359 = vst.msk [vmem:[%s265 + $0x14] sm:$0xf] %vm353, %v342
      %360 = vst.msk [vmem:[%s265 + $0x18] sm:$0xf] %vm353, %v343
      %361 = vst.msk [vmem:[%s265 + $0x1c] sm:$0xf] %vm353, %v344
      %vm362 = vcmask 130048
      %363 = vst.msk [vmem:[#allocation2] sm:$0xff] %vm362, 0.0
      %364 = vst.msk [vmem:[#allocation2 + $0x8] sm:$0xff] %vm362, 0.0
      %365 = vst.msk [vmem:[#allocation2 + $0x50] sm:$0xff] %vm362, 0.0
      %366 = vst.msk [vmem:[#allocation2 + $0x58] sm:$0xff] %vm362, 0.0
      %367 = vst.msk [vmem:[#allocation2 + $0x10] sm:$0xff] %vm362, %v313
      %368 = vst.msk [vmem:[#allocation2 + $0x18] sm:$0xff] %vm362, %v314
      %369 = vst.msk [vmem:[#allocation2 + $0x20] sm:$0xff] %vm362, %v315
      %370 = vst.msk [vmem:[#allocation2 + $0x28] sm:$0xff] %vm362, %v316
      %371 = vst.msk [vmem:[#allocation2 + $0x30] sm:$0xff] %vm362, %v317
      %372 = vst.msk [vmem:[#allocation2 + $0x38] sm:$0xff] %vm362, %v318
      %373 = vst.msk [vmem:[#allocation2 + $0x40] sm:$0xff] %vm362, %v319
      %374 = vst.msk [vmem:[#allocation2 + $0x48] sm:$0xff] %vm362, %v320
      %v375 = vlaneseq
      %v376 = vshrl.u32 %v375, 7
      %v377 = vadd.s32 %v376, 8
      %v378 = vadd.s32 %v376, 16
      %v379 = vadd.s32 %v376, 24
      %v380 = vadd.s32 %v376, 32
      %v381 = vadd.s32 %v376, 40
      %v382 = vadd.s32 %v376, 48
      %v383 = vadd.s32 %v376, 56
      %vm384 = vcmp.lt.s32.totalorder %v376, 0
      %v385 = vsub.s32 0, %v376
      %v386 = vsel %vm384, %v385, %v376
      %v387 = vshrl.u32 %v386, 3
      %v388 = vand.u32 %v386, 7
      %v389 = vsub.s32 0, %v388
      %v390 = vsel %vm384, %v389, %v388
      %vm391 = vcmp.lt.s32.totalorder %v377, 0
      %v392 = vsub.s32 0, %v377
      %v393 = vsel %vm391, %v392, %v377
      %v394 = vshrl.u32 %v393, 3
      %v395 = vand.u32 %v393, 7
      %v396 = vsub.s32 0, %v395
      %v397 = vsel %vm391, %v396, %v395
      %vm398 = vcmp.lt.s32.totalorder %v378, 0
      %v399 = vsub.s32 0, %v378
      %v400 = vsel %vm398, %v399, %v378
      %v401 = vshrl.u32 %v400, 3
      %v402 = vand.u32 %v400, 7
      %v403 = vsub.s32 0, %v402
      %v404 = vsel %vm398, %v403, %v402
      %vm405 = vcmp.lt.s32.totalorder %v379, 0
      %v406 = vsub.s32 0, %v379
      %v407 = vsel %vm405, %v406, %v379
      %v408 = vshrl.u32 %v407, 3
      %v409 = vand.u32 %v407, 7
      %v410 = vsub.s32 0, %v409
      %v411 = vsel %vm405, %v410, %v409
      %vm412 = vcmp.lt.s32.totalorder %v380, 0
      %v413 = vsub.s32 0, %v380
      %v414 = vsel %vm412, %v413, %v380
      %v415 = vshrl.u32 %v414, 3
      %v416 = vand.u32 %v414, 7
      %v417 = vsub.s32 0, %v416
      %v418 = vsel %vm412, %v417, %v416
      %vm419 = vcmp.lt.s32.totalorder %v381, 0
      %v420 = vsub.s32 0, %v381
      %v421 = vsel %vm419, %v420, %v381
      %v422 = vshrl.u32 %v421, 3
      %v423 = vand.u32 %v421, 7
      %v424 = vsub.s32 0, %v423
      %v425 = vsel %vm419, %v424, %v423
      %vm426 = vcmp.lt.s32.totalorder %v382, 0
      %v427 = vsub.s32 0, %v382
      %v428 = vsel %vm426, %v427, %v382
      %v429 = vshrl.u32 %v428, 3
      %v430 = vand.u32 %v428, 7
      %v431 = vsub.s32 0, %v430
      %v432 = vsel %vm426, %v431, %v430
      %vm433 = vcmp.lt.s32.totalorder %v383, 0
      %v434 = vsub.s32 0, %v383
      %v435 = vsel %vm433, %v434, %v383
      %v436 = vshrl.u32 %v435, 3
      %v437 = vand.u32 %v435, 7
      %v438 = vsub.s32 0, %v437
      %v439 = vsel %vm433, %v438, %v437
      %vm440 = vcmp.ne.s32.totalorder %v390, 0
      %vm441 = vcmp.ne.s32.totalorder %v397, 0
      %vm442 = vcmp.ne.s32.totalorder %v404, 0
      %vm443 = vcmp.ne.s32.totalorder %v411, 0
      %vm444 = vcmp.ne.s32.totalorder %v418, 0
      %vm445 = vcmp.ne.s32.totalorder %v425, 0
      %vm446 = vcmp.ne.s32.totalorder %v432, 0
      %vm447 = vcmp.ne.s32.totalorder %v439, 0
      %vm448 = vcmp.lt.s32.totalorder %v390, 0
      %vm449 = vcmp.lt.s32.totalorder %v397, 0
      %vm450 = vcmp.lt.s32.totalorder %v404, 0
      %vm451 = vcmp.lt.s32.totalorder %v411, 0
      %vm452 = vcmp.lt.s32.totalorder %v418, 0
      %vm453 = vcmp.lt.s32.totalorder %v425, 0
      %vm454 = vcmp.lt.s32.totalorder %v432, 0
      %vm455 = vcmp.lt.s32.totalorder %v439, 0
      %vm456 = vmand %vm448, %vm440
      %vm457 = vmand %vm449, %vm441
      %vm458 = vmand %vm450, %vm442
      %vm459 = vmand %vm451, %vm443
      %vm460 = vmand %vm452, %vm444
      %vm461 = vmand %vm453, %vm445
      %vm462 = vmand %vm454, %vm446
      %vm463 = vmand %vm455, %vm447
      %v464 = vadd.s32 %v390, 8
      %v465 = vadd.s32 %v397, 8
      %v466 = vadd.s32 %v404, 8
      %v467 = vadd.s32 %v411, 8
      %v468 = vadd.s32 %v418, 8
      %v469 = vadd.s32 %v425, 8
      %v470 = vadd.s32 %v432, 8
      %v471 = vadd.s32 %v439, 8
      %v472 = vsel %vm456, %v464, %v390
      %v473 = vsel %vm457, %v465, %v397
      %v474 = vsel %vm458, %v466, %v404
      %v475 = vsel %vm459, %v467, %v411
      %v476 = vsel %vm460, %v468, %v418
      %v477 = vsel %vm461, %v469, %v425
      %v478 = vsel %vm462, %v470, %v432
      %v479 = vsel %vm463, %v471, %v439
      %vm480 = vcmp.ge.s32.totalorder %v472, 1
      %vm481 = vcmp.ge.s32.totalorder %v473, 1
      %vm482 = vcmp.ge.s32.totalorder %v474, 1
      %vm483 = vcmp.ge.s32.totalorder %v475, 1
      %vm484 = vcmp.ge.s32.totalorder %v476, 1
      %vm485 = vcmp.ge.s32.totalorder %v477, 1
      %vm486 = vcmp.ge.s32.totalorder %v478, 1
      %vm487 = vcmp.ge.s32.totalorder %v479, 1
      %v488 = vsel %vm480, 1, 0
      %v489 = vsel %vm481, 1, 0
      %v490 = vsel %vm482, 1, 0
      %v491 = vsel %vm483, 1, 0
      %v492 = vsel %vm484, 1, 0
      %v493 = vsel %vm485, 1, 0
      %v494 = vsel %vm486, 1, 0
      %v495 = vsel %vm487, 1, 0
      %v496 = vcvt.s32.f32 %v488
      %v497 = vcvt.s32.f32 %v489
      %v498 = vcvt.s32.f32 %v490
      %v499 = vcvt.s32.f32 %v491
      %v500 = vcvt.s32.f32 %v492
      %v501 = vcvt.s32.f32 %v493
      %v502 = vcvt.s32.f32 %v494
      %v503 = vcvt.s32.f32 %v495
      %vm504 = vcmp.le.s32.totalorder %v472, 6
      %vm505 = vcmp.le.s32.totalorder %v473, 6
      %vm506 = vcmp.le.s32.totalorder %v474, 6
      %vm507 = vcmp.le.s32.totalorder %v475, 6
      %vm508 = vcmp.le.s32.totalorder %v476, 6
      %vm509 = vcmp.le.s32.totalorder %v477, 6
      %vm510 = vcmp.le.s32.totalorder %v478, 6
      %vm511 = vcmp.le.s32.totalorder %v479, 6
      %v512 = vsel %vm504, 1, 0
      %v513 = vsel %vm505, 1, 0
      %v514 = vsel %vm506, 1, 0
      %v515 = vsel %vm507, 1, 0
      %v516 = vsel %vm508, 1, 0
      %v517 = vsel %vm509, 1, 0
      %v518 = vsel %vm510, 1, 0
      %v519 = vsel %vm511, 1, 0
      %v520 = vcvt.s32.f32 %v512
      %v521 = vcvt.s32.f32 %v513
      %v522 = vcvt.s32.f32 %v514
      %v523 = vcvt.s32.f32 %v515
      %v524 = vcvt.s32.f32 %v516
      %v525 = vcvt.s32.f32 %v517
      %v526 = vcvt.s32.f32 %v518
      %v527 = vcvt.s32.f32 %v519
      %v528 = vld [vmem:[#allocation2 + $0x7] sm:$0xff]
      %v529 = vld [vmem:[#allocation2 + $0xf] sm:$0xff]
      %v530 = vld [vmem:[#allocation2 + $0x17] sm:$0xff]
      %v531 = vld [vmem:[#allocation2 + $0x1f] sm:$0xff]
      %v532 = vld [vmem:[#allocation2 + $0x27] sm:$0xff]
      %v533 = vld [vmem:[#allocation2 + $0x2f] sm:$0xff]
      %v534 = vld [vmem:[#allocation2 + $0x37] sm:$0xff]
      %v535 = vld [vmem:[#allocation2 + $0x3f] sm:$0xff]
      %v536 = vmul.f32 %v528, %v496
      %v537 = vmul.f32 %v529, %v497
      %v538 = vmul.f32 %v530, %v498
      %v539 = vmul.f32 %v531, %v499
      %v540 = vmul.f32 %v532, %v500
      %v541 = vmul.f32 %v533, %v501
      %v542 = vmul.f32 %v534, %v502
      %v543 = vmul.f32 %v535, %v503
      %v544 = vld [vmem:[%s1] sm:$0x1]
      %v545 = vlaneseq
      %v546 = vshrl.u32 %v545, 7
      %v547 = vsub.s32 0, %v546
      %v548 = vrot.slane %v544, %v547
      %v549 = vmul.f32 %v536, %v548
      %v550 = vmul.f32 %v537, %v548
      %v551 = vmul.f32 %v538, %v548
      %v552 = vmul.f32 %v539, %v548
      %v553 = vmul.f32 %v540, %v548
      %v554 = vmul.f32 %v541, %v548
      %v555 = vmul.f32 %v542, %v548
      %v556 = vmul.f32 %v543, %v548
      %v557 = vadd.f32 %v549, 0.0
      %v558 = vadd.f32 %v550, 0.0
      %v559 = vadd.f32 %v551, 0.0
      %v560 = vadd.f32 %v552, 0.0
      %v561 = vadd.f32 %v553, 0.0
      %v562 = vadd.f32 %v554, 0.0
      %v563 = vadd.f32 %v555, 0.0
      %v564 = vadd.f32 %v556, 0.0
      %v565 = vld [vmem:[#allocation2 + $0x8] sm:$0xff]
      %v566 = vld [vmem:[#allocation2 + $0x10] sm:$0xff]
      %v567 = vld [vmem:[#allocation2 + $0x18] sm:$0xff]
      %v568 = vld [vmem:[#allocation2 + $0x20] sm:$0xff]
      %v569 = vld [vmem:[#allocation2 + $0x28] sm:$0xff]
      %v570 = vld [vmem:[#allocation2 + $0x30] sm:$0xff]
      %v571 = vld [vmem:[#allocation2 + $0x38] sm:$0xff]
      %v572 = vld [vmem:[#allocation2 + $0x40] sm:$0xff]
      %v573 = vld [vmem:[%s1 + $0x1] sm:$0x1]
      %v574 = vlaneseq
      %v575 = vshrl.u32 %v574, 7
      %v576 = vsub.s32 0, %v575
      %v577 = vrot.slane %v573, %v576
      %v578 = vmul.f32 %v565, %v577
      %v579 = vmul.f32 %v566, %v577
      %v580 = vmul.f32 %v567, %v577
      %v581 = vmul.f32 %v568, %v577
      %v582 = vmul.f32 %v569, %v577
      %v583 = vmul.f32 %v570, %v577
      %v584 = vmul.f32 %v571, %v577
      %v585 = vmul.f32 %v572, %v577
      %v586 = vadd.f32 %v557, %v578
      %v587 = vadd.f32 %v558, %v579
      %v588 = vadd.f32 %v559, %v580
      %v589 = vadd.f32 %v560, %v581
      %v590 = vadd.f32 %v561, %v582
      %v591 = vadd.f32 %v562, %v583
      %v592 = vadd.f32 %v563, %v584
      %v593 = vadd.f32 %v564, %v585
      %v594 = vld [vmem:[#allocation2 + $0x9] sm:$0xff]
      %v595 = vld [vmem:[#allocation2 + $0x11] sm:$0xff]
      %v596 = vld [vmem:[#allocation2 + $0x19] sm:$0xff]
      %v597 = vld [vmem:[#allocation2 + $0x21] sm:$0xff]
      %v598 = vld [vmem:[#allocation2 + $0x29] sm:$0xff]
      %v599 = vld [vmem:[#allocation2 + $0x31] sm:$0xff]
      %v600 = vld [vmem:[#allocation2 + $0x39] sm:$0xff]
      %v601 = vld [vmem:[#allocation2 + $0x41] sm:$0xff]
      %v602 = vmul.f32 %v594, %v520
      %v603 = vmul.f32 %v595, %v521
      %v604 = vmul.f32 %v596, %v522
      %v605 = vmul.f32 %v597, %v523
      %v606 = vmul.f32 %v598, %v524
      %v607 = vmul.f32 %v599, %v525
      %v608 = vmul.f32 %v600, %v526
      %v609 = vmul.f32 %v601, %v527
      %v610 = vld [vmem:[%s1 + $0x2] sm:$0x1]
      %v611 = vlaneseq
      %v612 = vshrl.u32 %v611, 7
      %v613 = vsub.s32 0, %v612
      %v614 = vrot.slane %v610, %v613
      %v615 = vmul.f32 %v602, %v614
      %v616 = vmul.f32 %v603, %v614
      %v617 = vmul.f32 %v604, %v614
      %v618 = vmul.f32 %v605, %v614
      %v619 = vmul.f32 %v606, %v614
      %v620 = vmul.f32 %v607, %v614
      %v621 = vmul.f32 %v608, %v614
      %v622 = vmul.f32 %v609, %v614
      %v623 = vadd.f32 %v586, %v615
      %v624 = vadd.f32 %v587, %v616
      %v625 = vadd.f32 %v588, %v617
      %v626 = vadd.f32 %v589, %v618
      %v627 = vadd.f32 %v590, %v619
      %v628 = vadd.f32 %v591, %v620
      %v629 = vadd.f32 %v592, %v621
      %v630 = vadd.f32 %v593, %v622
      %v631 = vld [vmem:[#allocation2 + $0x47] sm:$0xff]
      %v632 = vmul.f32 %v529, %v496
      %v633 = vmul.f32 %v530, %v497
      %v634 = vmul.f32 %v531, %v498
      %v635 = vmul.f32 %v532, %v499
      %v636 = vmul.f32 %v533, %v500
      %v637 = vmul.f32 %v534, %v501
      %v638 = vmul.f32 %v535, %v502
      %v639 = vmul.f32 %v631, %v503
      %v640 = vld [vmem:[%s1 + $0x3] sm:$0x1]
      %v641 = vlaneseq
      %v642 = vshrl.u32 %v641, 7
      %v643 = vsub.s32 0, %v642
      %v644 = vrot.slane %v640, %v643
      %v645 = vmul.f32 %v632, %v644
      %v646 = vmul.f32 %v633, %v644
      %v647 = vmul.f32 %v634, %v644
      %v648 = vmul.f32 %v635, %v644
      %v649 = vmul.f32 %v636, %v644
      %v650 = vmul.f32 %v637, %v644
      %v651 = vmul.f32 %v638, %v644
      %v652 = vmul.f32 %v639, %v644
      %v653 = vadd.f32 %v623, %v645
      %v654 = vadd.f32 %v624, %v646
      %v655 = vadd.f32 %v625, %v647
      %v656 = vadd.f32 %v626, %v648
      %v657 = vadd.f32 %v627, %v649
      %v658 = vadd.f32 %v628, %v650
      %v659 = vadd.f32 %v629, %v651
      %v660 = vadd.f32 %v630, %v652
      %v661 = vld [vmem:[#allocation2 + $0x48] sm:$0xff]
      %v662 = vld [vmem:[%s1 + $0x4] sm:$0x1]
      %v663 = vlaneseq
      %v664 = vshrl.u32 %v663, 7
      %v665 = vsub.s32 0, %v664
      %v666 = vrot.slane %v662, %v665
      %v667 = vmul.f32 %v566, %v666
      %v668 = vmul.f32 %v567, %v666
      %v669 = vmul.f32 %v568, %v666
      %v670 = vmul.f32 %v569, %v666
      %v671 = vmul.f32 %v570, %v666
      %v672 = vmul.f32 %v571, %v666
      %v673 = vmul.f32 %v572, %v666
      %v674 = vmul.f32 %v661, %v666
      %v675 = vadd.f32 %v653, %v667
      %v676 = vadd.f32 %v654, %v668
      %v677 = vadd.f32 %v655, %v669
      %v678 = vadd.f32 %v656, %v670
      %v679 = vadd.f32 %v657, %v671
      %v680 = vadd.f32 %v658, %v672
      %v681 = vadd.f32 %v659, %v673
      %v682 = vadd.f32 %v660, %v674
      %v683 = vld [vmem:[#allocation2 + $0x49] sm:$0xff]
      %v684 = vmul.f32 %v595, %v520
      %v685 = vmul.f32 %v596, %v521
      %v686 = vmul.f32 %v597, %v522
      %v687 = vmul.f32 %v598, %v523
      %v688 = vmul.f32 %v599, %v524
      %v689 = vmul.f32 %v600, %v525
      %v690 = vmul.f32 %v601, %v526
      %v691 = vmul.f32 %v683, %v527
      %v692 = vld [vmem:[%s1 + $0x5] sm:$0x1]
      %v693 = vlaneseq
      %v694 = vshrl.u32 %v693, 7
      %v695 = vsub.s32 0, %v694
      %v696 = vrot.slane %v692, %v695
      %v697 = vmul.f32 %v684, %v696
      %v698 = vmul.f32 %v685, %v696
      %v699 = vmul.f32 %v686, %v696
      %v700 = vmul.f32 %v687, %v696
      %v701 = vmul.f32 %v688, %v696
      %v702 = vmul.f32 %v689, %v696
      %v703 = vmul.f32 %v690, %v696
      %v704 = vmul.f32 %v691, %v696
      %v705 = vadd.f32 %v675, %v697
      %v706 = vadd.f32 %v676, %v698
      %v707 = vadd.f32 %v677, %v699
      %v708 = vadd.f32 %v678, %v700
      %v709 = vadd.f32 %v679, %v701
      %v710 = vadd.f32 %v680, %v702
      %v711 = vadd.f32 %v681, %v703
      %v712 = vadd.f32 %v682, %v704
      %v713 = vld [vmem:[#allocation2 + $0x4f] sm:$0xff]
      %v714 = vmul.f32 %v530, %v496
      %v715 = vmul.f32 %v531, %v497
      %v716 = vmul.f32 %v532, %v498
      %v717 = vmul.f32 %v533, %v499
      %v718 = vmul.f32 %v534, %v500
      %v719 = vmul.f32 %v535, %v501
      %v720 = vmul.f32 %v631, %v502
      %v721 = vmul.f32 %v713, %v503
      %v722 = vld [vmem:[%s1 + $0x6] sm:$0x1]
      %v723 = vlaneseq
      %v724 = vshrl.u32 %v723, 7
      %v725 = vsub.s32 0, %v724
      %v726 = vrot.slane %v722, %v725
      %v727 = vmul.f32 %v714, %v726
      %v728 = vmul.f32 %v715, %v726
      %v729 = vmul.f32 %v716, %v726
      %v730 = vmul.f32 %v717, %v726
      %v731 = vmul.f32 %v718, %v726
      %v732 = vmul.f32 %v719, %v726
      %v733 = vmul.f32 %v720, %v726
      %v734 = vmul.f32 %v721, %v726
      %v735 = vadd.f32 %v705, %v727
      %v736 = vadd.f32 %v706, %v728
      %v737 = vadd.f32 %v707, %v729
      %v738 = vadd.f32 %v708, %v730
      %v739 = vadd.f32 %v709, %v731
      %v740 = vadd.f32 %v710, %v732
      %v741 = vadd.f32 %v711, %v733
      %v742 = vadd.f32 %v712, %v734
      %v743 = vld [vmem:[#allocation2 + $0x50] sm:$0xff]
      %v744 = vld [vmem:[%s1 + $0x7] sm:$0x1]
      %v745 = vlaneseq
      %v746 = vshrl.u32 %v745, 7
      %v747 = vsub.s32 0, %v746
      %v748 = vrot.slane %v744, %v747
      %v749 = vmul.f32 %v567, %v748
      %v750 = vmul.f32 %v568, %v748
      %v751 = vmul.f32 %v569, %v748
      %v752 = vmul.f32 %v570, %v748
      %v753 = vmul.f32 %v571, %v748
      %v754 = vmul.f32 %v572, %v748
      %v755 = vmul.f32 %v661, %v748
      %v756 = vmul.f32 %v743, %v748
      %v757 = vadd.f32 %v735, %v749
      %v758 = vadd.f32 %v736, %v750
      %v759 = vadd.f32 %v737, %v751
      %v760 = vadd.f32 %v738, %v752
      %v761 = vadd.f32 %v739, %v753
      %v762 = vadd.f32 %v740, %v754
      %v763 = vadd.f32 %v741, %v755
      %v764 = vadd.f32 %v742, %v756
      %v765 = vld [vmem:[#allocation2 + $0x51] sm:$0xff]
      %v766 = vmul.f32 %v596, %v520
      %v767 = vmul.f32 %v597, %v521
      %v768 = vmul.f32 %v598, %v522
      %v769 = vmul.f32 %v599, %v523
      %v770 = vmul.f32 %v600, %v524
      %v771 = vmul.f32 %v601, %v525
      %v772 = vmul.f32 %v683, %v526
      %v773 = vmul.f32 %v765, %v527
      %v774 = vld [vmem:[%s1 + $0x8] sm:$0x1]
      %v775 = vlaneseq
      %v776 = vshrl.u32 %v775, 7
      %v777 = vsub.s32 0, %v776
      %v778 = vrot.slane %v774, %v777
      %v779 = vmul.f32 %v766, %v778
      %v780 = vmul.f32 %v767, %v778
      %v781 = vmul.f32 %v768, %v778
      %v782 = vmul.f32 %v769, %v778
      %v783 = vmul.f32 %v770, %v778
      %v784 = vmul.f32 %v771, %v778
      %v785 = vmul.f32 %v772, %v778
      %v786 = vmul.f32 %v773, %v778
      %v787 = vadd.f32 %v757, %v779
      %v788 = vadd.f32 %v758, %v780
      %v789 = vadd.f32 %v759, %v781
      %v790 = vadd.f32 %v760, %v782
      %v791 = vadd.f32 %v761, %v783
      %v792 = vadd.f32 %v762, %v784
      %v793 = vadd.f32 %v763, %v785
      %v794 = vadd.f32 %v764, %v786
      %795 = vst.msk [vmem:[%s270] sm:$0xff] %vm362, %v787
      %796 = vst.msk [vmem:[%s270 + $0x8] sm:$0xff] %vm362, %v788
      %797 = vst.msk [vmem:[%s270 + $0x10] sm:$0xff] %vm362, %v789
      %798 = vst.msk [vmem:[%s270 + $0x18] sm:$0xff] %vm362, %v790
      %799 = vst.msk [vmem:[%s270 + $0x20] sm:$0xff] %vm362, %v791
      %800 = vst.msk [vmem:[%s270 + $0x28] sm:$0xff] %vm362, %v792
      %801 = vst.msk [vmem:[%s270 + $0x30] sm:$0xff] %vm362, %v793
      %802 = vst.msk [vmem:[%s270 + $0x38] sm:$0xff] %vm362, %v794
      %v803 = vsel %vm362, %v787, 0.0
      %v804 = vsel %vm362, %v788, 0.0
      %v805 = vadd.f32 %v803, %v804
      %v806 = vsel %vm362, %v789, 0.0
      %v807 = vadd.f32 %v805, %v806
      %v808 = vsel %vm362, %v790, 0.0
      %v809 = vadd.f32 %v807, %v808
      %v810 = vsel %vm362, %v791, 0.0
      %v811 = vadd.f32 %v809, %v810
      %v812 = vsel %vm362, %v792, 0.0
      %v813 = vadd.f32 %v811, %v812
      %v814 = vsel %vm362, %v793, 0.0
      %v815 = vadd.f32 %v813, %v814
      %v816 = vsel %vm362, %v794, 0.0
      %v817 = vadd.f32 %v815, %v816
      %v818 = vrot.slane %v817, 4
      %v819 = vadd.f32 %v817, %v818
      %v820 = vrot.slane %v819, 2
      %v821 = vadd.f32 %v819, %v820
      %v822 = vrot.slane %v821, 1
      %v823 = vadd.f32 %v821, %v822
      %v824 = vmul.f32 %v787, %v787
      %v825 = vmul.f32 %v788, %v788
      %v826 = vmul.f32 %v789, %v789
      %v827 = vmul.f32 %v790, %v790
      %v828 = vmul.f32 %v791, %v791
      %v829 = vmul.f32 %v792, %v792
      %v830 = vmul.f32 %v793, %v793
      %v831 = vmul.f32 %v794, %v794
      %v832 = vsel %vm362, %v824, 0.0
      %v833 = vsel %vm362, %v825, 0.0
      %v834 = vadd.f32 %v832, %v833
      %v835 = vsel %vm362, %v826, 0.0
      %v836 = vadd.f32 %v834, %v835
      %v837 = vsel %vm362, %v827, 0.0
      %v838 = vadd.f32 %v836, %v837
      %v839 = vsel %vm362, %v828, 0.0
      %v840 = vadd.f32 %v838, %v839
      %v841 = vsel %vm362, %v829, 0.0
      %v842 = vadd.f32 %v840, %v841
      %v843 = vsel %vm362, %v830, 0.0
      %v844 = vadd.f32 %v842, %v843
      %v845 = vsel %vm362, %v831, 0.0
      %v846 = vadd.f32 %v844, %v845
      %v847 = vrot.slane %v846, 4
      %v848 = vadd.f32 %v846, %v847
      %v849 = vrot.slane %v848, 2
      %v850 = vadd.f32 %v848, %v849
      %v851 = vrot.slane %v850, 1
      %v852 = vadd.f32 %v850, %v851
      %vm853 = vcmask 1040384
      %v854 = vsel %vm853, %v823, %v852
      %vm855 = vcmask 123904
      %856 = vst.msk [vmem:[%s274] sm:$0x3] %vm855, %v854
      %p857 = scmp.lt.s32.totalorder %s18, 1
      %s858 = scalar_select %p857, %s18, 1
      %s859 = smul.addr %s858, 8
      %s860 = smul.addr %s859, 4
      %s861 = scalar_lea.vmem %s4, %s860
      %p862 = scmp.lt.s32.totalorder %s18, 1
      %s863 = scalar_select %p862, %s18, 1
      %s864 = smul.addr %s863, 8
      %s865 = smul.addr %s864, 8
      %s866 = scalar_lea.vmem %s5, %s865
      %p867 = scmp.lt.s32.totalorder %s18, 1
      %s868 = scalar_select %p867, %s18, 1
      %s869 = smul.addr %s868, 2
      %s870 = scalar_lea.vmem %s6, %s869
      // Predicated region
      $region37: #{ghost_mlp_forward.5} parent=35 // pred_check
        %p871 = pneg %p125
      $region38: #{ghost_mlp_forward.5} parent=35 // pred_check_branch
        %873 = sbr.rel (%p871) target = $region40
      $region39: #{ghost_mlp_forward.5} parent=35 // pred_region
        _
      $region40: #{ghost_mlp_forward.5} parent=35 // pred_fallthru
        _
      // Predicated region
      $region41: #{ghost_mlp_forward.5} parent=35 // pred_check
        %p874 = pneg %p151
      $region42: #{ghost_mlp_forward.5} parent=35 // pred_check_branch
        %876 = sbr.rel (%p874) target = $region44
      $region43: #{ghost_mlp_forward.5} parent=35 // pred_region
        _
      $region44: #{ghost_mlp_forward.5} parent=35 // pred_fallthru
        _
      // Predicated region
      $region45: #{ghost_mlp_forward.5} parent=35 // pred_check
        %p877 = pneg %p177
      $region46: #{ghost_mlp_forward.5} parent=35 // pred_check_branch
        %879 = sbr.rel (%p877) target = $region48
      $region47: #{ghost_mlp_forward.5} parent=35 // pred_region
        _
      $region48: #{ghost_mlp_forward.5} parent=35 // pred_fallthru
        _
    $region36: #{ghost_mlp_forward.5} parent=5 // pred_fallthru
      _
    %p880 = scmp.le.s32.totalorder 2, %s13
    // Predicated region
    $region49: #{ghost_mlp_forward.5} parent=5 // pred_check
      %p881 = pneg %p880
    $region50: #{ghost_mlp_forward.5} parent=5 // pred_check_branch
      %883 = sbr.rel (%p881) target = $region52
    $region51: #{ghost_mlp_forward.5} parent=5 // pred_region
      %s884 = ssub.s32 %s13, 2
      // Predicated region
      $region53: #{ghost_mlp_forward.5} parent=51 // pred_check
        %p885 = pneg %p131
      $region54: #{ghost_mlp_forward.5} parent=51 // pred_check_branch
        %887 = sbr.rel (%p885) target = $region56
      $region55: #{ghost_mlp_forward.5} parent=51 // pred_region
        %p888 = scmp.lt.s32.totalorder %s19, 1
        %s889 = scalar_select %p888, %s19, 1
        %s890 = smul.addr %s889, 8
        %s891 = smul.addr %s890, 4
        %s892 = scalar_lea.vmem %s4, %s891
      $region56: #{ghost_mlp_forward.5} parent=51 // pred_fallthru
        _
      // Predicated region
      $region57: #{ghost_mlp_forward.5} parent=51 // pred_check
        %p893 = pneg %p157
      $region58: #{ghost_mlp_forward.5} parent=51 // pred_check_branch
        %895 = sbr.rel (%p893) target = $region60
      $region59: #{ghost_mlp_forward.5} parent=51 // pred_region
        %p896 = scmp.lt.s32.totalorder %s19, 1
        %s897 = scalar_select %p896, %s19, 1
        %s898 = smul.addr %s897, 8
        %s899 = smul.addr %s898, 8
        %s900 = scalar_lea.vmem %s5, %s899
      $region60: #{ghost_mlp_forward.5} parent=51 // pred_fallthru
        _
      // Predicated region
      $region61: #{ghost_mlp_forward.5} parent=51 // pred_check
        %p901 = pneg %p183
      $region62: #{ghost_mlp_forward.5} parent=51 // pred_check_branch
        %903 = sbr.rel (%p901) target = $region64
      $region63: #{ghost_mlp_forward.5} parent=51 // pred_region
        %p904 = scmp.lt.s32.totalorder %s19, 1
        %s905 = scalar_select %p904, %s19, 1
        %s906 = smul.addr %s905, 2
        %s907 = scalar_lea.vmem %s6, %s906
      $region64: #{ghost_mlp_forward.5} parent=51 // pred_fallthru
        _
    $region52: #{ghost_mlp_forward.5} parent=5 // pred_fallthru
      _
  $region6: #{ghost_mlp_forward.5} parent=0 // loop_footer
    %s17 = sadd.s32 1, %s13
  $region7: #{ghost_mlp_forward.5} parent=0 // loop_footer_branch
    %12 = sbr.rel target = $region3
  $region8: #{ghost_mlp_forward.5} parent=0 // loop_exit
    _

</llo_original>
